<compile_context>
chip_gen: v5e
topology: v5e:2x2
jax: 0.10.0
libtpu: 0.0.40
codegen_flags: <defaults>
</compile_context>

<pallas_src>
import functools

import numpy as np
import jax
import jax.numpy as jnp
from jax import lax
from jax.experimental import pallas as pl
from jax.experimental.pallas import tpu as pltpu

LEAKY_SLOPE = 0.2
BN_EPS = 1e-5


# --------------------------------------------------------------------------- #
# In-kernel helpers.                                                           #
# --------------------------------------------------------------------------- #
def _boundary_masks(rows, h):
    """(rows, 1) column masks: valid row above / below within the same sample
    (h rows per sample) -> 'same' zero padding along h."""
    rid = lax.broadcasted_iota(jnp.int32, (rows, 1), 0)
    not_first = (rid % h) != 0
    not_last = (rid % h) != (h - 1)
    return not_first, not_last


def _conv3x3_banded(v, m_ref, not_first, not_last):
    """3x3 'same' conv in the fused (rows, w*Cin) layout as ONE bf16 MXU matmul.

    v: (rows, K) f32.  m_ref: (3*K, O) bf16 band matrix (kernel rows 0/1/2
    concatenated along K; w-taps and w-side 'same' padding pre-folded in)."""
    rows = v.shape[0]
    vu = jnp.where(not_first, pltpu.roll(v, 1, axis=0), 0.0)         # row above
    vd = jnp.where(not_last, pltpu.roll(v, rows - 1, axis=0), 0.0)   # row below
    vcat = jnp.concatenate([vu, v, vd], axis=1).astype(jnp.bfloat16)
    return jnp.dot(vcat, m_ref[...], preferred_element_type=jnp.float32)


def _block_lane_stats(y):
    """Per-lane partial BN stats for this block: row0 = sum(y), row1 = sum of
    squares centered at the block's per-lane mean.  Combined exactly across
    blocks in the wrapper (parallel/Chan variance) -> avoids the
    E[x^2]-mean^2 cancellation of a single-pass global formula."""
    rows = y.shape[0]
    s = jnp.sum(y, axis=0, keepdims=True)
    mu = s * (1.0 / rows)
    d = y - mu
    m2 = jnp.sum(d * d, axis=0, keepdims=True)
    return jnp.concatenate([s, m2], axis=0)        # (2, lanes) f32


# --------------------------------------------------------------------------- #
# Stage kernels (all gridded over the sample-block axis, "parallel").          #
# --------------------------------------------------------------------------- #
def _stage1_kernel(*refs, h, with_conv0):
    """[optional conv0] -> conv1; outputs pre-BN activation + per-block stats."""
    if with_conv0:
        x_ref, m0_ref, m1_ref, y1_ref, st_ref = refs
    else:
        x_ref, m1_ref, y1_ref, st_ref = refs
        m0_ref = None
    v = x_ref[...]
    nf, nl = _boundary_masks(v.shape[0], h)
    if with_conv0:
        v = _conv3x3_banded(v, m0_ref, nf, nl)     # Conv2d(Cin,Cin,3,'same'), no BN/act
    y = _conv3x3_banded(v, m1_ref, nf, nl)         # Conv2d(Cin,Cin,3,'same')
    y1_ref[...] = y
    st_ref[...] = _block_lane_stats(y)[None]


def _stage2_kernel(y1_ref, m2_ref, sc1_ref, sh1_ref, y2_ref, st_ref, *, h):
    """BN1 affine + LeakyReLU + conv2 (lane-padded output) + per-block stats."""
    z = y1_ref[...] * sc1_ref[...] + sh1_ref[...]  # BN1 (precomputed scale/shift)
    z = jnp.maximum(z, LEAKY_SLOPE * z)            # LeakyReLU(0.2), one VPU op
    nf, nl = _boundary_masks(z.shape[0], h)
    y = _conv3x3_banded(z, m2_ref, nf, nl)         # Conv2d(Cin,Cout,3,'same'), padded lanes
    y2_ref[...] = y
    st_ref[...] = _block_lane_stats(y)[None]


def _stage3_kernel(y2_ref, sc2_ref, sh2_ref, out_ref):
    """BN2 affine + LeakyReLU (still lane-dense, padded lanes sliced by wrapper)."""
    t = y2_ref[...] * sc2_ref[...] + sh2_ref[...]
    out_ref[...] = jnp.maximum(t, LEAKY_SLOPE * t)


# --------------------------------------------------------------------------- #
# Host-side (one-time) preprocessing.                                          #
# --------------------------------------------------------------------------- #
def _band_matrix(wt_oihw, width, out_lanes=None, dtype=jnp.bfloat16):
    """(Co, Ci, 3, 3) OIHW conv weight -> (3*width*Ci, out_lanes) band matrix.

    M[kh*width*Ci + jp*Ci + ci, j*Co + co] = wt[co, ci, kh, kw] with
    jp == j + kw - 1 (valid), so a single matmul applies all 9 taps and the
    w-side 'same' padding (h handled by roll + mask).  Optionally zero-pads the
    output-lane dim so downstream stores are full-lane (unmasked)."""
    co, ci, kh, kw = wt_oihw.shape
    sel = np.zeros((kw, width, width), np.float32)
    for b in range(kw):
        for j in range(width):
            jp = j + b - (kw // 2)
            if 0 <= jp < width:
                sel[b, jp, j] = 1.0
    m = jnp.einsum('kpj,oihk->hpijo', jnp.asarray(sel), wt_oihw,
                   precision=lax.Precision.HIGHEST)
    m = m.reshape(kh * width * ci, width * co)
    if out_lanes is not None and out_lanes > width * co:
        m = jnp.pad(m, ((0, 0), (0, out_lanes - width * co)))
    # TODO(synk): for large w (w*Ci >> 128) tile the band matmul along lanes or
    # fall back to per-tap (Ci,Co) matmuls to stay inside v7x's 64 MiB VMEM and
    # avoid the ~w/3 zero-FLOP inflation of the band matrix.
    return m.astype(dtype)


def prepare_combine_heads(params, pooling, W):
    """One-time (per parameter set / spatial width) preprocessing: bf16 band
    matrices + pass-through BN/upsample params.  Keeps the per-call path free
    of the small einsums / casts (perf-review item)."""
    width = 2 * W if pooling else W
    c_out = params['w2'].shape[0]
    out_lanes = max(128, -(-(width * c_out) // 128) * 128)
    prepped = {
        'm1': _band_matrix(params['w1'], width),
        'm2': _band_matrix(params['w2'], width, out_lanes=out_lanes),
        'g1': params['g1'], 'b1': params['b1'],
        'g2': params['g2'], 'b2': params['b2'],
    }
    if pooling:
        prepped['up_w'] = params['up_w']
        prepped['up_b'] = params['up_b']
    else:
        prepped['m0'] = _band_matrix(params['w0'], width)
    return prepped


def _fold_bn_stats(stats, rows_per_block, width, channels, gamma, beta):
    """Combine per-block per-lane [sum, centered-M2] into per-channel BN affine
    (scale, shift) with the parallel (Chan) variance formula.  f32 throughout
    (do not cast this path to bf16)."""
    nb = stats.shape[0]
    count = nb * rows_per_block * width                       # N*H*W per channel
    s = stats[:, 0, :].reshape(nb, width, channels)
    m2 = stats[:, 1, :].reshape(nb, width, channels)
    mu_grp = s / rows_per_block
    mean = s.sum(axis=(0, 1)) / count
    dev = mu_grp - mean
    var = (m2.sum(axis=(0, 1))
           + rows_per_block * (dev * dev).sum(axis=(0, 1))) / count
    var = jnp.maximum(var, 0.0)                               # biased variance, guarded
    scale = gamma * lax.rsqrt(var + BN_EPS)
    shift = beta - mean * scale
    return scale, shift


def _pick_samples_per_block(n, h):
    """Smallest divisor of n whose block height (d*h rows) is sublane-aligned."""
    for d in range(1, n + 1):
        if n % d == 0 and (d * h) % 8 == 0:
            return d
    return n


# --------------------------------------------------------------------------- #
# Forward wrapper.                                                             #
# --------------------------------------------------------------------------- #
@functools.partial(jax.jit, static_argnames=('pooling',))
def combine_heads_forward(x, prepped, pooling):
    """x: (B, V, T, Heads, H, W) -> squeeze(view(B, V, h, w)), as in CombineHeads."""
    B, V, T, Heads, H, W = x.shape
    c_in = T * Heads
    n = B * V
    xr = x.reshape(n, c_in, H, W)

    if pooling:
        # ConvTranspose2d(C,C,2,stride 2) emitted directly in the fused
        # (n*2H, 2W*C) layout: no separate NCHW->NHWC transpose pass.
        # TODO(synk): the upsample itself stays in XLA glue (a single einsum).
        h, w = 2 * H, 2 * W
        up = jnp.einsum('nchw,cokl->nhkwlo', xr, prepped['up_w'],
                        precision=lax.Precision.HIGHEST)
        x_fused = up.reshape(n * h, w * c_in) + jnp.tile(prepped['up_b'], w)[None, :]
    else:
        h, w = H, W
        x_fused = jnp.transpose(xr, (0, 2, 3, 1)).reshape(n * h, w * c_in)

    c_out = prepped['g2'].shape[0]
    lin = w * c_in                               # fused lanes of layer-1 activations
    out_lanes = prepped['m2'].shape[1]           # conv2 output lanes (>=128, padded)
    lv = w * c_out                               # valid output lanes
    R = n * h

    spb = _pick_samples_per_block(n, h)          # samples per grid block
    bh = spb * h                                 # block rows
    nb = n // spb
    grid = (nb,)

    # Derived VMEM budget: weights + double-buffered activation blocks + headroom.
    weight_bytes = sum(int(np.prod(prepped[k].shape)) * 2
                       for k in ('m0', 'm1', 'm2') if k in prepped)
    blk_bytes = bh * max(lin, out_lanes) * 4
    vmem_limit = int(min(max(weight_bytes + 8 * blk_bytes + (2 << 20), 8 << 20),
                         48 << 20))
    cp = pltpu.CompilerParams(dimension_semantics=("parallel",),
                              vmem_limit_bytes=vmem_limit)

    spec_rows_lin = pl.BlockSpec((bh, lin), lambda i: (i, 0))
    spec_rows_out = pl.BlockSpec((bh, out_lanes), lambda i: (i, 0))
    spec_stats_lin = pl.BlockSpec((1, 2, lin), lambda i: (i, 0, 0))
    spec_stats_out = pl.BlockSpec((1, 2, out_lanes), lambda i: (i, 0, 0))

    def const_spec(a):        # full-array block, fetched once (constant block index)
        return pl.BlockSpec(a.shape, lambda i: (0, 0))

    # ---- stage 1: [conv0] + conv1 + per-block stats ------------------------ #
    s1_args, s1_specs = [x_fused], [spec_rows_lin]
    if not pooling:
        s1_args.append(prepped['m0'])
        s1_specs.append(const_spec(prepped['m0']))
    s1_args.append(prepped['m1'])
    s1_specs.append(const_spec(prepped['m1']))

    y1, stats1 = pl.pallas_call(
        functools.partial(_stage1_kernel, h=h, with_conv0=not pooling),
        grid=grid,
        in_specs=s1_specs,
        out_specs=(spec_rows_lin, spec_stats_lin),
        out_shape=(jax.ShapeDtypeStruct((R, lin), jnp.float32),
                   jax.ShapeDtypeStruct((nb, 2, lin), jnp.float32)),
        compiler_params=cp,
    )(*s1_args)

    # ---- BN1 fold (tiny XLA glue between the two BN passes) ---------------- #
    scale1, shift1 = _fold_bn_stats(stats1, bh, w, c_in, prepped['g1'], prepped['b1'])
    sc1 = jnp.tile(scale1, w)[None, :]
    sh1 = jnp.tile(shift1, w)[None, :]

    # ---- stage 2: BN1 + LeakyReLU + conv2 + per-block stats ---------------- #
    y2, stats2 = pl.pallas_call(
        functools.partial(_stage2_kernel, h=h),
        grid=grid,
        in_specs=[spec_rows_lin, const_spec(prepped['m2']),
                  const_spec(sc1), const_spec(sh1)],
        out_specs=(spec_rows_out, spec_stats_out),
        out_shape=(jax.ShapeDtypeStruct((R, out_lanes), jnp.float32),
                   jax.ShapeDtypeStruct((nb, 2, out_lanes), jnp.float32)),
        compiler_params=cp,
    )(y1, prepped['m2'], sc1, sh1)

    # ---- BN2 fold (only the valid lanes; padded lanes are exactly zero) ---- #
    scale2, shift2 = _fold_bn_stats(stats2[:, :, :lv], bh, w, c_out,
                                    prepped['g2'], prepped['b2'])
    sc2 = jnp.pad(jnp.tile(scale2, w), (0, out_lanes - lv))[None, :]
    sh2 = jnp.pad(jnp.tile(shift2, w), (0, out_lanes - lv))[None, :]

    # ---- stage 3: BN2 + LeakyReLU ------------------------------------------ #
    out_full = pl.pallas_call(
        _stage3_kernel,
        grid=grid,
        in_specs=[spec_rows_out, const_spec(sc2), const_spec(sh2)],
        out_specs=spec_rows_out,
        out_shape=jax.ShapeDtypeStruct((R, out_lanes), jnp.float32),
        compiler_params=cp,
    )(y2, sc2, sh2)

    # (N*h, out_lanes) -> valid lanes -> (N, C_out, h, w) -> view(B, V, h, w)
    out = jnp.transpose(out_full[:, :lv].reshape(n, h, w, c_out), (0, 3, 1, 2))
    # Final squeeze mirrors torch.squeeze(): drops B / V too if they equal 1.
    return jnp.squeeze(out.reshape(B, V, h, w))


# --------------------------------------------------------------------------- #
# Params + pure-JAX (XLA) reference for validation.                            #
# --------------------------------------------------------------------------- #
def _conv_transpose_2x2_s2(x, wt, bias):
    """Exact PyTorch ConvTranspose2d(C, C, kernel_size=2, stride=2) in NCHW."""
    n, _, hh, ww = x.shape
    co = wt.shape[1]
    y = jnp.einsum('nchw,cokl->nohkwl', x, wt, precision=lax.Precision.HIGHEST)
    return y.reshape(n, co, 2 * hh, 2 * ww) + bias[None, :, None, None]


def init_params(key, in_channels, out_channels, pooling, kernel_size=(3, 3)):
    """Deterministic PyTorch-like init (uniform +-1/sqrt(fan_in)); BN gamma=1, beta=0."""
    kh, kw = kernel_size
    k0, k1, k2, k3 = jax.random.split(key, 4)

    def conv_w(k, co, ci):
        bound = 1.0 / np.sqrt(ci * kh * kw)
        return jax.random.uniform(k, (co, ci, kh, kw), jnp.float32, -bound, bound)

    params = {
        'w1': conv_w(k1, in_channels, in_channels),
        'w2': conv_w(k2, out_channels, in_channels),
        'g1': jnp.ones((in_channels,), jnp.float32),
        'b1': jnp.zeros((in_channels,), jnp.float32),
        'g2': jnp.ones((out_channels,), jnp.float32),
        'b2': jnp.zeros((out_channels,), jnp.float32),
    }
    if pooling:
        bound = 1.0 / np.sqrt(in_channels * 2 * 2)
        params['up_w'] = jax.random.uniform(
            k0, (in_channels, in_channels, 2, 2), jnp.float32, -bound, bound)
        params['up_b'] = jax.random.uniform(
            k3, (in_channels,), jnp.float32, -bound, bound)
    else:
        params['w0'] = conv_w(k0, in_channels, in_channels)
    return params


def reference_forward(x, params, pooling):
    """Pure-JAX (XLA, f32 HIGHEST) reference of the PyTorch forward."""
    B, V, T, Heads, H, W = x.shape
    c_in = T * Heads
    xr = x.reshape(B * V, c_in, H, W)

    def conv(inp, wt):
        return lax.conv_general_dilated(
            inp, wt, (1, 1), 'SAME',
            dimension_numbers=('NCHW', 'OIHW', 'NCHW'),
            precision=lax.Precision.HIGHEST)

    def bn(y, g, b):
        m = y.mean(axis=(0, 2, 3), keepdims=True)
        v = ((y - m) ** 2).mean(axis=(0, 2, 3), keepdims=True)
        yn = (y - m) * lax.rsqrt(v + BN_EPS)
        return yn * g.reshape(1, -1, 1, 1) + b.reshape(1, -1, 1, 1)

    def lrelu(t):
        return jnp.where(t > 0, t, LEAKY_SLOPE * t)

    if pooling:
        y = _conv_transpose_2x2_s2(xr, params['up_w'], params['up_b'])
    else:
        y = conv(xr, params['w0'])
    y = lrelu(bn(conv(y, params['w1']), params['g1'], params['b1']))
    y = lrelu(bn(conv(y, params['w2']), params['g2'], params['b2']))
    _, _, h, w = y.shape
    return jnp.squeeze(y.reshape(B, V, h, w))


if __name__ == "__main__":
    key = jax.random.PRNGKey(0)
    kx, kp_a, kp_b = jax.random.split(key, 3)

    B, V, T, Heads, H, W = 2, 3, 4, 2, 16, 16
    c_in = T * Heads            # 8  -> fused lane width w*C = 128
    c_out = 1                   # CombineHeads' view(B, V, h, w) requires out_channels == 1

    x = jax.random.normal(kx, (B, V, T, Heads, H, W), dtype=jnp.float32)

    # pooling=False: Conv2d layer0 + both Conv+BN+LReLU blocks in the Pallas stages.
    params_a = init_params(kp_a, c_in, c_out, pooling=False)
    prepped_a = prepare_combine_heads(params_a, pooling=False, W=W)
    out_a = jax.block_until_ready(combine_heads_forward(x, prepped_a, pooling=False))
    assert out_a.shape == (B, V, H, W), out_a.shape
    ref_a = reference_forward(x, params_a, pooling=False)
    # bf16 MXU operands (f32 accumulate) -> slightly relaxed tolerance vs f32 ref.
    np.testing.assert_allclose(np.asarray(out_a), np.asarray(ref_a), rtol=2e-2, atol=2e-2)

    # pooling=True: ConvTranspose2d upsample emitted in the fused layout (XLA glue).
    params_b = init_params(kp_b, c_in, c_out, pooling=True)
    prepped_b = prepare_combine_heads(params_b, pooling=True, W=W)
    out_b = jax.block_until_ready(combine_heads_forward(x, prepped_b, pooling=True))
    assert out_b.shape == (B, V, 2 * H, 2 * W), out_b.shape
    ref_b = reference_forward(x, params_b, pooling=True)
    np.testing.assert_allclose(np.asarray(out_b), np.asarray(ref_b), rtol=2e-2, atol=2e-2)

    print("KERNEL_OK")
</pallas_src>

<mosaic_0001>
module attributes {stable_mosaic.version = 11 : i64} {
  func.func @_stage1_kernel(%arg0: i32, %arg1: memref<16x128xf32, #tpu.memory_space<vmem>>, %arg2: memref<384x128xbf16, #tpu.memory_space<vmem>>, %arg3: memref<384x128xbf16, #tpu.memory_space<vmem>>, %arg4: memref<16x128xf32, #tpu.memory_space<vmem>>, %arg5: memref<1x2x128xf32, #tpu.memory_space<vmem>>) attributes {dimension_semantics = [#tpu.dimension_semantics<parallel>], iteration_bounds = array<i64: 6>, scalar_prefetch = 0 : i64, scratch_operands = 0 : i64, tpu.core_type = #tpu.core_type<tc>, window_params = [{transform_indices = @transform_0, window_bounds = array<i64: 16, 128>}, {pipeline_mode = #tpu.pipeline_mode<synchronous>, transform_indices = @transform_1, window_bounds = array<i64: 384, 128>}, {pipeline_mode = #tpu.pipeline_mode<synchronous>, transform_indices = @transform_2, window_bounds = array<i64: 384, 128>}, {transform_indices = @transform_3, window_bounds = array<i64: 16, 128>}, {transform_indices = @transform_4, window_bounds = array<i64: 1, 2, 128>}]} {
    %c0 = arith.constant 0 : index
    %c0_0 = arith.constant 0 : index
    %0 = vector.load %arg1[%c0, %c0_0] : memref<16x128xf32, #tpu.memory_space<vmem>>, vector<16x128xf32>
    %1 = tpu.iota {dimensions = array<i32: 0>} : vector<16x1xi32>
    %c16_i32 = arith.constant 16 : i32
    %c0_i32 = arith.constant 0 : i32
    %2 = arith.cmpi eq, %c16_i32, %c0_i32 : i32
    %c1_i32 = arith.constant 1 : i32
    %3 = arith.select %2, %c1_i32, %c16_i32 : i32
    %4 = vector.broadcast %3 : i32 to vector<16x1xi32>
    %5 = arith.remsi %1, %4 : vector<16x1xi32>
    %c0_i32_1 = arith.constant 0 : i32
    %6 = vector.broadcast %c0_i32_1 : i32 to vector<16x1xi32>
    %7 = arith.cmpi ne, %5, %6 : vector<16x1xi32>
    %c0_i32_2 = arith.constant 0 : i32
    %8 = vector.broadcast %c0_i32_2 : i32 to vector<16x1xi32>
    %9 = arith.cmpi slt, %5, %8 : vector<16x1xi32>
    %c0_i32_3 = arith.constant 0 : i32
    %10 = arith.cmpi slt, %3, %c0_i32_3 : i32
    %11 = vector.broadcast %10 : i1 to vector<16x1xi1>
    %12 = vector.broadcast %11 : vector<16x1xi1> to vector<16x1xi1>
    %13 = arith.xori %9, %12 : vector<16x1xi1>
    %14 = arith.andi %13, %7 : vector<16x1xi1>
    %15 = vector.broadcast %3 : i32 to vector<16x1xi32>
    %16 = arith.addi %5, %15 : vector<16x1xi32>
    %17 = arith.select %14, %16, %5 : vector<16x1xi1>, vector<16x1xi32>
    %c0_i32_4 = arith.constant 0 : i32
    %18 = vector.broadcast %c0_i32_4 : i32 to vector<16x1xi32>
    %19 = arith.cmpi ne, %17, %18 : vector<16x1xi32>
    %c16_i32_5 = arith.constant 16 : i32
    %c0_i32_6 = arith.constant 0 : i32
    %20 = arith.cmpi eq, %c16_i32_5, %c0_i32_6 : i32
    %c1_i32_7 = arith.constant 1 : i32
    %21 = arith.select %20, %c1_i32_7, %c16_i32_5 : i32
    %22 = vector.broadcast %21 : i32 to vector<16x1xi32>
    %23 = arith.remsi %1, %22 : vector<16x1xi32>
    %c0_i32_8 = arith.constant 0 : i32
    %24 = vector.broadcast %c0_i32_8 : i32 to vector<16x1xi32>
    %25 = arith.cmpi ne, %23, %24 : vector<16x1xi32>
    %c0_i32_9 = arith.constant 0 : i32
    %26 = vector.broadcast %c0_i32_9 : i32 to vector<16x1xi32>
    %27 = arith.cmpi slt, %23, %26 : vector<16x1xi32>
    %c0_i32_10 = arith.constant 0 : i32
    %28 = arith.cmpi slt, %21, %c0_i32_10 : i32
    %29 = vector.broadcast %28 : i1 to vector<16x1xi1>
    %30 = vector.broadcast %29 : vector<16x1xi1> to vector<16x1xi1>
    %31 = arith.xori %27, %30 : vector<16x1xi1>
    %32 = arith.andi %31, %25 : vector<16x1xi1>
    %33 = vector.broadcast %21 : i32 to vector<16x1xi32>
    %34 = arith.addi %23, %33 : vector<16x1xi32>
    %35 = arith.select %32, %34, %23 : vector<16x1xi1>, vector<16x1xi32>
    %c15_i32 = arith.constant 15 : i32
    %36 = vector.broadcast %c15_i32 : i32 to vector<16x1xi32>
    %37 = arith.cmpi ne, %35, %36 : vector<16x1xi32>
    %c1_i32_11 = arith.constant 1 : i32
    %38 = tpu.dynamic_rotate %0 by %c1_i32_11 dim 0 : vector<16x128xf32>, i32 -> vector<16x128xf32>
    %cst = arith.constant 0.000000e+00 : f32
    %39 = vector.shape_cast %19 : vector<16x1xi1> to vector<16x1xi1>
    %40 = vector.broadcast %39 : vector<16x1xi1> to vector<16x128xi1>
    %41 = vector.broadcast %cst : f32 to vector<16x128xf32>
    %42 = arith.select %40, %38, %41 : vector<16x128xi1>, vector<16x128xf32>
    %c15_i32_12 = arith.constant 15 : i32
    %43 = tpu.dynamic_rotate %0 by %c15_i32_12 dim 0 : vector<16x128xf32>, i32 -> vector<16x128xf32>
    %cst_13 = arith.constant 0.000000e+00 : f32
    %44 = vector.shape_cast %37 : vector<16x1xi1> to vector<16x1xi1>
    %45 = vector.broadcast %44 : vector<16x1xi1> to vector<16x128xi1>
    %46 = vector.broadcast %cst_13 : f32 to vector<16x128xf32>
    %47 = arith.select %45, %43, %46 : vector<16x128xi1>, vector<16x128xf32>
    %48 = tpu.concatenate %42, %0, %47 in 1 : vector<16x128xf32>, vector<16x128xf32>, vector<16x128xf32> -> vector<16x384xf32>
    %49 = arith.truncf %48 : vector<16x384xf32> to vector<16x384xbf16>
    %c0_14 = arith.constant 0 : index
    %c0_15 = arith.constant 0 : index
    %50 = vector.load %arg2[%c0_14, %c0_15] : memref<384x128xbf16, #tpu.memory_space<vmem>>, vector<384x128xbf16>
    %cst_16 = arith.constant dense<0.000000e+00> : vector<16x128xf32>
    %51 = tpu.matmul %49, %50, %cst_16 {dimension_numbers = #tpu.dot_dimension_numbers<[1], [0], [0], [1], [0, 0, 1, 1], [], []>} : vector<16x384xbf16>, vector<384x128xbf16>, vector<16x128xf32> -> vector<16x128xf32>
    %c1_i32_17 = arith.constant 1 : i32
    %52 = tpu.dynamic_rotate %51 by %c1_i32_17 dim 0 : vector<16x128xf32>, i32 -> vector<16x128xf32>
    %cst_18 = arith.constant 0.000000e+00 : f32
    %53 = vector.shape_cast %19 : vector<16x1xi1> to vector<16x1xi1>
    %54 = vector.broadcast %53 : vector<16x1xi1> to vector<16x128xi1>
    %55 = vector.broadcast %cst_18 : f32 to vector<16x128xf32>
    %56 = arith.select %54, %52, %55 : vector<16x128xi1>, vector<16x128xf32>
    %c15_i32_19 = arith.constant 15 : i32
    %57 = tpu.dynamic_rotate %51 by %c15_i32_19 dim 0 : vector<16x128xf32>, i32 -> vector<16x128xf32>
    %cst_20 = arith.constant 0.000000e+00 : f32
    %58 = vector.shape_cast %37 : vector<16x1xi1> to vector<16x1xi1>
    %59 = vector.broadcast %58 : vector<16x1xi1> to vector<16x128xi1>
    %60 = vector.broadcast %cst_20 : f32 to vector<16x128xf32>
    %61 = arith.select %59, %57, %60 : vector<16x128xi1>, vector<16x128xf32>
    %62 = tpu.concatenate %56, %51, %61 in 1 : vector<16x128xf32>, vector<16x128xf32>, vector<16x128xf32> -> vector<16x384xf32>
    %63 = arith.truncf %62 : vector<16x384xf32> to vector<16x384xbf16>
    %c0_21 = arith.constant 0 : index
    %c0_22 = arith.constant 0 : index
    %64 = vector.load %arg3[%c0_21, %c0_22] : memref<384x128xbf16, #tpu.memory_space<vmem>>, vector<384x128xbf16>
    %cst_23 = arith.constant dense<0.000000e+00> : vector<16x128xf32>
    %65 = tpu.matmul %63, %64, %cst_23 {dimension_numbers = #tpu.dot_dimension_numbers<[1], [0], [0], [1], [0, 0, 1, 1], [], []>} : vector<16x384xbf16>, vector<384x128xbf16>, vector<16x128xf32> -> vector<16x128xf32>
    %c0_24 = arith.constant 0 : index
    %c0_25 = arith.constant 0 : index
    %66 = vector.load %arg4[%c0_24, %c0_25] : memref<16x128xf32, #tpu.memory_space<vmem>>, vector<16x128xf32>
    tpu.vector_store %arg4[%c0_24, %c0_25], %65 {strides = array<i32>} : memref<16x128xf32, #tpu.memory_space<vmem>>, vector<16x128xf32>,
    %cst_26 = arith.constant dense<0.000000e+00> : vector<128xf32>
    %67 = vector.multi_reduction <add>, %65, %cst_26 [0] : vector<16x128xf32> to vector<128xf32>
    %68 = vector.shape_cast %67 : vector<128xf32> to vector<1x128xf32>
    %cst_27 = arith.constant 6.250000e-02 : f32
    %69 = vector.broadcast %cst_27 : f32 to vector<1x128xf32>
    %70 = arith.mulf %68, %69 : vector<1x128xf32>
    %71 = vector.broadcast %70 : vector<1x128xf32> to vector<16x128xf32>
    %72 = arith.subf %65, %71 : vector<16x128xf32>
    %73 = arith.mulf %72, %72 : vector<16x128xf32>
    %cst_28 = arith.constant dense<0.000000e+00> : vector<128xf32>
    %74 = vector.multi_reduction <add>, %73, %cst_28 [0] : vector<16x128xf32> to vector<128xf32>
    %75 = vector.shape_cast %74 : vector<128xf32> to vector<1x128xf32>
    %76 = tpu.concatenate %68, %75 in 0 : vector<1x128xf32>, vector<1x128xf32> -> vector<2x128xf32>
    %77 = vector.shape_cast %76 : vector<2x128xf32> to vector<1x2x128xf32>
    %c0_29 = arith.constant 0 : index
    %c0_30 = arith.constant 0 : index
    %c0_31 = arith.constant 0 : index
    %78 = vector.load %arg5[%c0_29, %c0_30, %c0_31] : memref<1x2x128xf32, #tpu.memory_space<vmem>>, vector<1x2x128xf32>
    tpu.vector_store %arg5[%c0_29, %c0_30, %c0_31], %77 {strides = array<i32>} : memref<1x2x128xf32, #tpu.memory_space<vmem>>, vector<1x2x128xf32>,
    return
  }
  func.func @transform_0(%arg0: i32) -> (i32, i32) {
    %c0_i32 = arith.constant 0 : i32
    %c0_i32_0 = arith.constant 0 : i32
    return %arg0, %c0_i32 : i32, i32
  }
  func.func @transform_1(%arg0: i32) -> (i32, i32) {
    %c0_i32 = arith.constant 0 : i32
    %c0_i32_0 = arith.constant 0 : i32
    %c0_i32_1 = arith.constant 0 : i32
    return %c0_i32, %c0_i32_0 : i32, i32
  }
  func.func @transform_2(%arg0: i32) -> (i32, i32) {
    %c0_i32 = arith.constant 0 : i32
    %c0_i32_0 = arith.constant 0 : i32
    %c0_i32_1 = arith.constant 0 : i32
    return %c0_i32, %c0_i32_0 : i32, i32
  }
  func.func @transform_3(%arg0: i32) -> (i32, i32) {
    %c0_i32 = arith.constant 0 : i32
    %c0_i32_0 = arith.constant 0 : i32
    return %arg0, %c0_i32 : i32, i32
  }
  func.func @transform_4(%arg0: i32) -> (i32, i32, i32) {
    %c0_i32 = arith.constant 0 : i32
    %c0_i32_0 = arith.constant 0 : i32
    %c0_i32_1 = arith.constant 0 : i32
    return %arg0, %c0_i32, %c0_i32_0 : i32, i32, i32
  }
}

module attributes {stable_mosaic.version = 11 : i64} {
  func.func @_stage2_kernel(%arg0: i32, %arg1: memref<16x128xf32, #tpu.memory_space<vmem>>, %arg2: memref<384x128xbf16, #tpu.memory_space<vmem>>, %arg3: memref<1x128xf32, #tpu.memory_space<vmem>>, %arg4: memref<1x128xf32, #tpu.memory_space<vmem>>, %arg5: memref<16x128xf32, #tpu.memory_space<vmem>>, %arg6: memref<1x2x128xf32, #tpu.memory_space<vmem>>) attributes {dimension_semantics = [#tpu.dimension_semantics<parallel>], iteration_bounds = array<i64: 6>, scalar_prefetch = 0 : i64, scratch_operands = 0 : i64, tpu.core_type = #tpu.core_type<tc>, window_params = [{transform_indices = @transform_0, window_bounds = array<i64: 16, 128>}, {pipeline_mode = #tpu.pipeline_mode<synchronous>, transform_indices = @transform_1, window_bounds = array<i64: 384, 128>}, {pipeline_mode = #tpu.pipeline_mode<synchronous>, transform_indices = @transform_2, window_bounds = array<i64: 1, 128>}, {pipeline_mode = #tpu.pipeline_mode<synchronous>, transform_indices = @transform_3, window_bounds = array<i64: 1, 128>}, {transform_indices = @transform_4, window_bounds = array<i64: 16, 128>}, {transform_indices = @transform_5, window_bounds = array<i64: 1, 2, 128>}]} {
    %c0 = arith.constant 0 : index
    %c0_0 = arith.constant 0 : index
    %0 = vector.load %arg1[%c0, %c0_0] : memref<16x128xf32, #tpu.memory_space<vmem>>, vector<16x128xf32>
    %c0_1 = arith.constant 0 : index
    %c0_2 = arith.constant 0 : index
    %1 = vector.load %arg3[%c0_1, %c0_2] : memref<1x128xf32, #tpu.memory_space<vmem>>, vector<1x128xf32>
    %2 = vector.broadcast %1 : vector<1x128xf32> to vector<16x128xf32>
    %3 = arith.mulf %0, %2 : vector<16x128xf32>
    %c0_3 = arith.constant 0 : index
    %c0_4 = arith.constant 0 : index
    %4 = vector.load %arg4[%c0_3, %c0_4] : memref<1x128xf32, #tpu.memory_space<vmem>>, vector<1x128xf32>
    %5 = vector.broadcast %4 : vector<1x128xf32> to vector<16x128xf32>
    %6 = arith.addf %3, %5 : vector<16x128xf32>
    %cst = arith.constant 2.000000e-01 : f32
    %7 = vector.broadcast %cst : f32 to vector<16x128xf32>
    %8 = arith.mulf %7, %6 : vector<16x128xf32>
    %9 = arith.maximumf %6, %8 : vector<16x128xf32>
    %10 = tpu.iota {dimensions = array<i32: 0>} : vector<16x1xi32>
    %c16_i32 = arith.constant 16 : i32
    %c0_i32 = arith.constant 0 : i32
    %11 = arith.cmpi eq, %c16_i32, %c0_i32 : i32
    %c1_i32 = arith.constant 1 : i32
    %12 = arith.select %11, %c1_i32, %c16_i32 : i32
    %13 = vector.broadcast %12 : i32 to vector<16x1xi32>
    %14 = arith.remsi %10, %13 : vector<16x1xi32>
    %c0_i32_5 = arith.constant 0 : i32
    %15 = vector.broadcast %c0_i32_5 : i32 to vector<16x1xi32>
    %16 = arith.cmpi ne, %14, %15 : vector<16x1xi32>
    %c0_i32_6 = arith.constant 0 : i32
    %17 = vector.broadcast %c0_i32_6 : i32 to vector<16x1xi32>
    %18 = arith.cmpi slt, %14, %17 : vector<16x1xi32>
    %c0_i32_7 = arith.constant 0 : i32
    %19 = arith.cmpi slt, %12, %c0_i32_7 : i32
    %20 = vector.broadcast %19 : i1 to vector<16x1xi1>
    %21 = vector.broadcast %20 : vector<16x1xi1> to vector<16x1xi1>
    %22 = arith.xori %18, %21 : vector<16x1xi1>
    %23 = arith.andi %22, %16 : vector<16x1xi1>
    %24 = vector.broadcast %12 : i32 to vector<16x1xi32>
    %25 = arith.addi %14, %24 : vector<16x1xi32>
    %26 = arith.select %23, %25, %14 : vector<16x1xi1>, vector<16x1xi32>
    %c0_i32_8 = arith.constant 0 : i32
    %27 = vector.broadcast %c0_i32_8 : i32 to vector<16x1xi32>
    %28 = arith.cmpi ne, %26, %27 : vector<16x1xi32>
    %c16_i32_9 = arith.constant 16 : i32
    %c0_i32_10 = arith.constant 0 : i32
    %29 = arith.cmpi eq, %c16_i32_9, %c0_i32_10 : i32
    %c1_i32_11 = arith.constant 1 : i32
    %30 = arith.select %29, %c1_i32_11, %c16_i32_9 : i32
    %31 = vector.broadcast %30 : i32 to vector<16x1xi32>
    %32 = arith.remsi %10, %31 : vector<16x1xi32>
    %c0_i32_12 = arith.constant 0 : i32
    %33 = vector.broadcast %c0_i32_12 : i32 to vector<16x1xi32>
    %34 = arith.cmpi ne, %32, %33 : vector<16x1xi32>
    %c0_i32_13 = arith.constant 0 : i32
    %35 = vector.broadcast %c0_i32_13 : i32 to vector<16x1xi32>
    %36 = arith.cmpi slt, %32, %35 : vector<16x1xi32>
    %c0_i32_14 = arith.constant 0 : i32
    %37 = arith.cmpi slt, %30, %c0_i32_14 : i32
    %38 = vector.broadcast %37 : i1 to vector<16x1xi1>
    %39 = vector.broadcast %38 : vector<16x1xi1> to vector<16x1xi1>
    %40 = arith.xori %36, %39 : vector<16x1xi1>
    %41 = arith.andi %40, %34 : vector<16x1xi1>
    %42 = vector.broadcast %30 : i32 to vector<16x1xi32>
    %43 = arith.addi %32, %42 : vector<16x1xi32>
    %44 = arith.select %41, %43, %32 : vector<16x1xi1>, vector<16x1xi32>
    %c15_i32 = arith.constant 15 : i32
    %45 = vector.broadcast %c15_i32 : i32 to vector<16x1xi32>
    %46 = arith.cmpi ne, %44, %45 : vector<16x1xi32>
    %c1_i32_15 = arith.constant 1 : i32
    %47 = tpu.dynamic_rotate %9 by %c1_i32_15 dim 0 : vector<16x128xf32>, i32 -> vector<16x128xf32>
    %cst_16 = arith.constant 0.000000e+00 : f32
    %48 = vector.shape_cast %28 : vector<16x1xi1> to vector<16x1xi1>
    %49 = vector.broadcast %48 : vector<16x1xi1> to vector<16x128xi1>
    %50 = vector.broadcast %cst_16 : f32 to vector<16x128xf32>
    %51 = arith.select %49, %47, %50 : vector<16x128xi1>, vector<16x128xf32>
    %c15_i32_17 = arith.constant 15 : i32
    %52 = tpu.dynamic_rotate %9 by %c15_i32_17 dim 0 : vector<16x128xf32>, i32 -> vector<16x128xf32>
    %cst_18 = arith.constant 0.000000e+00 : f32
    %53 = vector.shape_cast %46 : vector<16x1xi1> to vector<16x1xi1>
    %54 = vector.broadcast %53 : vector<16x1xi1> to vector<16x128xi1>
    %55 = vector.broadcast %cst_18 : f32 to vector<16x128xf32>
    %56 = arith.select %54, %52, %55 : vector<16x128xi1>, vector<16x128xf32>
    %57 = tpu.concatenate %51, %9, %56 in 1 : vector<16x128xf32>, vector<16x128xf32>, vector<16x128xf32> -> vector<16x384xf32>
    %58 = arith.truncf %57 : vector<16x384xf32> to vector<16x384xbf16>
    %c0_19 = arith.constant 0 : index
    %c0_20 = arith.constant 0 : index
    %59 = vector.load %arg2[%c0_19, %c0_20] : memref<384x128xbf16, #tpu.memory_space<vmem>>, vector<384x128xbf16>
    %cst_21 = arith.constant dense<0.000000e+00> : vector<16x128xf32>
    %60 = tpu.matmul %58, %59, %cst_21 {dimension_numbers = #tpu.dot_dimension_numbers<[1], [0], [0], [1], [0, 0, 1, 1], [], []>} : vector<16x384xbf16>, vector<384x128xbf16>, vector<16x128xf32> -> vector<16x128xf32>
    %c0_22 = arith.constant 0 : index
    %c0_23 = arith.constant 0 : index
    %61 = vector.load %arg5[%c0_22, %c0_23] : memref<16x128xf32, #tpu.memory_space<vmem>>, vector<16x128xf32>
    tpu.vector_store %arg5[%c0_22, %c0_23], %60 {strides = array<i32>} : memref<16x128xf32, #tpu.memory_space<vmem>>, vector<16x128xf32>,
    %cst_24 = arith.constant dense<0.000000e+00> : vector<128xf32>
    %62 = vector.multi_reduction <add>, %60, %cst_24 [0] : vector<16x128xf32> to vector<128xf32>
    %63 = vector.shape_cast %62 : vector<128xf32> to vector<1x128xf32>
    %cst_25 = arith.constant 6.250000e-02 : f32
    %64 = vector.broadcast %cst_25 : f32 to vector<1x128xf32>
    %65 = arith.mulf %63, %64 : vector<1x128xf32>
    %66 = vector.broadcast %65 : vector<1x128xf32> to vector<16x128xf32>
    %67 = arith.subf %60, %66 : vector<16x128xf32>
    %68 = arith.mulf %67, %67 : vector<16x128xf32>
    %cst_26 = arith.constant dense<0.000000e+00> : vector<128xf32>
    %69 = vector.multi_reduction <add>, %68, %cst_26 [0] : vector<16x128xf32> to vector<128xf32>
    %70 = vector.shape_cast %69 : vector<128xf32> to vector<1x128xf32>
    %71 = tpu.concatenate %63, %70 in 0 : vector<1x128xf32>, vector<1x128xf32> -> vector<2x128xf32>
    %72 = vector.shape_cast %71 : vector<2x128xf32> to vector<1x2x128xf32>
    %c0_27 = arith.constant 0 : index
    %c0_28 = arith.constant 0 : index
    %c0_29 = arith.constant 0 : index
    %73 = vector.load %arg6[%c0_27, %c0_28, %c0_29] : memref<1x2x128xf32, #tpu.memory_space<vmem>>, vector<1x2x128xf32>
    tpu.vector_store %arg6[%c0_27, %c0_28, %c0_29], %72 {strides = array<i32>} : memref<1x2x128xf32, #tpu.memory_space<vmem>>, vector<1x2x128xf32>,
    return
  }
  func.func @transform_0(%arg0: i32) -> (i32, i32) {
    %c0_i32 = arith.constant 0 : i32
    %c0_i32_0 = arith.constant 0 : i32
    return %arg0, %c0_i32 : i32, i32
  }
  func.func @transform_1(%arg0: i32) -> (i32, i32) {
    %c0_i32 = arith.constant 0 : i32
    %c0_i32_0 = arith.constant 0 : i32
    %c0_i32_1 = arith.constant 0 : i32
    return %c0_i32, %c0_i32_0 : i32, i32
  }
  func.func @transform_2(%arg0: i32) -> (i32, i32) {
    %c0_i32 = arith.constant 0 : i32
    %c0_i32_0 = arith.constant 0 : i32
    %c0_i32_1 = arith.constant 0 : i32
    return %c0_i32, %c0_i32_0 : i32, i32
  }
  func.func @transform_3(%arg0: i32) -> (i32, i32) {
    %c0_i32 = arith.constant 0 : i32
    %c0_i32_0 = arith.constant 0 : i32
    %c0_i32_1 = arith.constant 0 : i32
    return %c0_i32, %c0_i32_0 : i32, i32
  }
  func.func @transform_4(%arg0: i32) -> (i32, i32) {
    %c0_i32 = arith.constant 0 : i32
    %c0_i32_0 = arith.constant 0 : i32
    return %arg0, %c0_i32 : i32, i32
  }
  func.func @transform_5(%arg0: i32) -> (i32, i32, i32) {
    %c0_i32 = arith.constant 0 : i32
    %c0_i32_0 = arith.constant 0 : i32
    %c0_i32_1 = arith.constant 0 : i32
    return %arg0, %c0_i32, %c0_i32_0 : i32, i32, i32
  }
}

module attributes {stable_mosaic.version = 11 : i64} {
  func.func @_stage3_kernel(%arg0: i32, %arg1: memref<16x128xf32, #tpu.memory_space<vmem>>, %arg2: memref<1x128xf32, #tpu.memory_space<vmem>>, %arg3: memref<1x128xf32, #tpu.memory_space<vmem>>, %arg4: memref<16x128xf32, #tpu.memory_space<vmem>>) attributes {dimension_semantics = [#tpu.dimension_semantics<parallel>], iteration_bounds = array<i64: 6>, scalar_prefetch = 0 : i64, scratch_operands = 0 : i64, tpu.core_type = #tpu.core_type<tc>, window_params = [{transform_indices = @transform_0, window_bounds = array<i64: 16, 128>}, {pipeline_mode = #tpu.pipeline_mode<synchronous>, transform_indices = @transform_1, window_bounds = array<i64: 1, 128>}, {pipeline_mode = #tpu.pipeline_mode<synchronous>, transform_indices = @transform_2, window_bounds = array<i64: 1, 128>}, {transform_indices = @transform_3, window_bounds = array<i64: 16, 128>}]} {
    %c0 = arith.constant 0 : index
    %c0_0 = arith.constant 0 : index
    %0 = vector.load %arg1[%c0, %c0_0] : memref<16x128xf32, #tpu.memory_space<vmem>>, vector<16x128xf32>
    %c0_1 = arith.constant 0 : index
    %c0_2 = arith.constant 0 : index
    %1 = vector.load %arg2[%c0_1, %c0_2] : memref<1x128xf32, #tpu.memory_space<vmem>>, vector<1x128xf32>
    %2 = vector.broadcast %1 : vector<1x128xf32> to vector<16x128xf32>
    %3 = arith.mulf %0, %2 : vector<16x128xf32>
    %c0_3 = arith.constant 0 : index
    %c0_4 = arith.constant 0 : index
    %4 = vector.load %arg3[%c0_3, %c0_4] : memref<1x128xf32, #tpu.memory_space<vmem>>, vector<1x128xf32>
    %5 = vector.broadcast %4 : vector<1x128xf32> to vector<16x128xf32>
    %6 = arith.addf %3, %5 : vector<16x128xf32>
    %cst = arith.constant 2.000000e-01 : f32
    %7 = vector.broadcast %cst : f32 to vector<16x128xf32>
    %8 = arith.mulf %7, %6 : vector<16x128xf32>
    %9 = arith.maximumf %6, %8 : vector<16x128xf32>
    %c0_5 = arith.constant 0 : index
    %c0_6 = arith.constant 0 : index
    %10 = vector.load %arg4[%c0_5, %c0_6] : memref<16x128xf32, #tpu.memory_space<vmem>>, vector<16x128xf32>
    tpu.vector_store %arg4[%c0_5, %c0_6], %9 {strides = array<i32>} : memref<16x128xf32, #tpu.memory_space<vmem>>, vector<16x128xf32>,
    return
  }
  func.func @transform_0(%arg0: i32) -> (i32, i32) {
    %c0_i32 = arith.constant 0 : i32
    %c0_i32_0 = arith.constant 0 : i32
    return %arg0, %c0_i32 : i32, i32
  }
  func.func @transform_1(%arg0: i32) -> (i32, i32) {
    %c0_i32 = arith.constant 0 : i32
    %c0_i32_0 = arith.constant 0 : i32
    %c0_i32_1 = arith.constant 0 : i32
    return %c0_i32, %c0_i32_0 : i32, i32
  }
  func.func @transform_2(%arg0: i32) -> (i32, i32) {
    %c0_i32 = arith.constant 0 : i32
    %c0_i32_0 = arith.constant 0 : i32
    %c0_i32_1 = arith.constant 0 : i32
    return %c0_i32, %c0_i32_0 : i32, i32
  }
  func.func @transform_3(%arg0: i32) -> (i32, i32) {
    %c0_i32 = arith.constant 0 : i32
    %c0_i32_0 = arith.constant 0 : i32
    return %arg0, %c0_i32 : i32, i32
  }
}

</mosaic_0001>

<llo_original>
// kernel: tile.24
$region0: #{tile.24}
  %s0 = inlined_call_operand.vmem [shape: f32[16,8], index: 0, kind: input, shape index: {}]
  %s1 = inlined_call_operand.vmem [shape: f32[1,128], index: 1, kind: output, shape index: {}]
  $region1: #{tile.24} parent=0
    #allocation0 [shape = 'u8[4096]{0}', space=vmem, size = 0x1000, scoped, tag = 'scoped mem for output reshape']
    %v2 = vld [vmem:[%s0] sm:$0x1]
    %vm3 = vcmask 64512
    %4 = vst.msk [vmem:[#allocation0] sm:$0x1] %vm3, %v2
    %s5 = scalar_lea.vmem %s0, 15
    %v6 = vld [vmem:[%s5] sm:$0x1]
    %7 = vrot.lane.b32.xlu0 %v6, 120
    %v8 = vpop.permute.xlu0 %7
    %vm9 = vcmask 1048512
    %10 = vst.msk [vmem:[#allocation0] sm:$0x1] %vm9, %v8
    %s11 = scalar_lea.vmem %s0, 14
    %v12 = vld [vmem:[%s11] sm:$0x1]
    %13 = vrot.lane.b32.xlu0 %v12, 112
    %v14 = vpop.permute.xlu0 %13
    %vm15 = vcmask 982912
    %16 = vst.msk [vmem:[#allocation0] sm:$0x1] %vm15, %v14
    %s17 = scalar_lea.vmem %s0, 13
    %v18 = vld [vmem:[%s17] sm:$0x1]
    %19 = vrot.lane.b32.xlu0 %v18, 104
    %v20 = vpop.permute.xlu0 %19
    %vm21 = vcmask 917312
    %22 = vst.msk [vmem:[#allocation0] sm:$0x1] %vm21, %v20
    %s23 = scalar_lea.vmem %s0, 12
    %v24 = vld [vmem:[%s23] sm:$0x1]
    %25 = vrot.lane.b32.xlu0 %v24, 96
    %v26 = vpop.permute.xlu0 %25
    %vm27 = vcmask 851712
    %28 = vst.msk [vmem:[#allocation0] sm:$0x1] %vm27, %v26
    %s29 = scalar_lea.vmem %s0, 11
    %v30 = vld [vmem:[%s29] sm:$0x1]
    %31 = vrot.lane.b32.xlu0 %v30, 88
    %v32 = vpop.permute.xlu0 %31
    %vm33 = vcmask 786112
    %34 = vst.msk [vmem:[#allocation0] sm:$0x1] %vm33, %v32
    %s35 = scalar_lea.vmem %s0, 10
    %v36 = vld [vmem:[%s35] sm:$0x1]
    %37 = vrot.lane.b32.xlu0 %v36, 80
    %v38 = vpop.permute.xlu0 %37
    %vm39 = vcmask 720512
    %40 = vst.msk [vmem:[#allocation0] sm:$0x1] %vm39, %v38
    %s41 = scalar_lea.vmem %s0, 9
    %v42 = vld [vmem:[%s41] sm:$0x1]
    %43 = vrot.lane.b32.xlu0 %v42, 72
    %v44 = vpop.permute.xlu0 %43
    %vm45 = vcmask 654912
    %46 = vst.msk [vmem:[#allocation0] sm:$0x1] %vm45, %v44
    %s47 = scalar_lea.vmem %s0, 8
    %v48 = vld [vmem:[%s47] sm:$0x1]
    %49 = vrot.lane.b32.xlu0 %v48, 64
    %v50 = vpop.permute.xlu0 %49
    %vm51 = vcmask 589312
    %52 = vst.msk [vmem:[#allocation0] sm:$0x1] %vm51, %v50
    %s53 = scalar_lea.vmem %s0, 7
    %v54 = vld [vmem:[%s53] sm:$0x1]
    %55 = vrot.lane.b32.xlu0 %v54, 56
    %v56 = vpop.permute.xlu0 %55
    %vm57 = vcmask 523712
    %58 = vst.msk [vmem:[#allocation0] sm:$0x1] %vm57, %v56
    %s59 = scalar_lea.vmem %s0, 6
    %v60 = vld [vmem:[%s59] sm:$0x1]
    %61 = vrot.lane.b32.xlu0 %v60, 48
    %v62 = vpop.permute.xlu0 %61
    %vm63 = vcmask 458112
    %64 = vst.msk [vmem:[#allocation0] sm:$0x1] %vm63, %v62
    %s65 = scalar_lea.vmem %s0, 5
    %v66 = vld [vmem:[%s65] sm:$0x1]
    %67 = vrot.lane.b32.xlu0 %v66, 40
    %v68 = vpop.permute.xlu0 %67
    %vm69 = vcmask 392512
    %70 = vst.msk [vmem:[#allocation0] sm:$0x1] %vm69, %v68
    %s71 = scalar_lea.vmem %s0, 4
    %v72 = vld [vmem:[%s71] sm:$0x1]
    %73 = vrot.lane.b32.xlu0 %v72, 32
    %v74 = vpop.permute.xlu0 %73
    %vm75 = vcmask 326912
    %76 = vst.msk [vmem:[#allocation0] sm:$0x1] %vm75, %v74
    %s77 = scalar_lea.vmem %s0, 3
    %v78 = vld [vmem:[%s77] sm:$0x1]
    %79 = vrot.lane.b32.xlu0 %v78, 24
    %v80 = vpop.permute.xlu0 %79
    %vm81 = vcmask 261312
    %82 = vst.msk [vmem:[#allocation0] sm:$0x1] %vm81, %v80
    %s83 = scalar_lea.vmem %s0, 2
    %v84 = vld [vmem:[%s83] sm:$0x1]
    %85 = vrot.lane.b32.xlu0 %v84, 16
    %v86 = vpop.permute.xlu0 %85
    %vm87 = vcmask 195712
    %88 = vst.msk [vmem:[#allocation0] sm:$0x1] %vm87, %v86
    %s89 = scalar_lea.vmem %s0, 1
    %v90 = vld [vmem:[%s89] sm:$0x1]
    %91 = vrot.lane.b32.xlu0 %v90, 8
    %v92 = vpop.permute.xlu0 %91
    %vm93 = vcmask 130112
    %94 = vst.msk [vmem:[#allocation0] sm:$0x1] %vm93, %v92
    %s96 = ssub.s32 2, 1
    %v97 = vld [vmem:[#allocation0] sm:%s96]
    %s99 = ssub.s32 2, 1
    %100 = vst [vmem:[%s1] sm:%s99] %v97

// kernel: combine_heads_forward.3
$region0: #{combine_heads_forward.3}
  #allocation0 [shape = 'u32[]', space=smem, size = 0x4, offset = 0x4, fixed_abs, tag = 'smem constant byte address 0x4 - core index']
  #allocation1 [shape = 'u32[72,128]{1,0:T(1,128)}', space=vmem, size = 0x9000, scoped, tag = 'internal scratch']
  %s0 = inlined_call_operand.vmem [shape: f32[96,128], index: 0, kind: input, shape index: {}]
  %s1 = inlined_call_operand.vmem [shape: bf16[384,128], index: 1, kind: input, shape index: {}]
  %s2 = inlined_call_operand.vmem [shape: bf16[384,128], index: 2, kind: input, shape index: {}]
  %s3 = inlined_call_operand.vmem [shape: f32[96,128], index: 3, kind: output, shape index: {0}]
  %s4 = inlined_call_operand.vmem [shape: f32[6,2,128], index: 4, kind: output, shape index: {1}]
  %5 = xla_tuple %s3, %s4
  %s6 = sld [smem:[#allocation0]]
  $region53: #{combine_heads_forward.3} parent=0
    _
  %s8 = ssub.s32 1, %s6
  %s9 = scalar_select 0, %s8, %s6
  loop: start=0, step=1, limit=8
  $region2: #{combine_heads_forward.3} parent=0 // loop_pre_header
    _
  $region3: #{combine_heads_forward.3} parent=0 // loop_header
    %s11 = sphi 0, %s15
    %p12 = scmp.ge.s32.totalorder %s11, 8
    %s21 = sphi 0, %s23
    %s24 = sphi 0, %s21
    %s25 = sphi 0, %s24
    %s41 = sphi 0, %s25
    %s45 = sphi 0, %s45
    %s47 = sphi 0, %s45
    %s48 = sphi 0, %s47
    %s62 = sphi 0, %s48
    %s66 = sphi 0, %s66
    %s68 = sphi 0, %s66
    %s69 = sphi 0, %s68
    %s83 = sphi 0, %s69
    %s89 = sphi 0, %s91
    %s92 = sphi 0, %s89
    %s93 = sphi 0, %s92
    %s109 = sphi 0, %s93
    %s115 = sphi 0, %s117
    %s118 = sphi 0, %s115
    %s119 = sphi 0, %s118
    %s135 = sphi 0, %s119
  $region4: #{combine_heads_forward.3} parent=0 // loop_header_branch
    %14 = sbr.rel (%p12) target = $region8
  $region5: #{combine_heads_forward.3} parent=0 // loop_body
    %s16 = ssub.s32 %s11, 1
    %s17 = ssub.s32 %s11, 2
    %s18 = sadd.s32 %s11, 1
    %s19 = ssub.s32 %s11, %s18
    %p20 = scmp.eq.s32.totalorder %s19, 0
    %s22 = sadd.s32 %s21, 1
    %s23 = scalar_select %p20, %s21, %s22
    %p26 = pneg %p20
    %p27 = scmp.eq.s32.totalorder %s11, 5
    %p28 = por %p26, %p27
    %p29 = scmp.ne.s32.totalorder %s21, %s24
    %p30 = scmp.eq.s32.totalorder %s11, 0
    %p31 = por %p29, %p30
    %p32 = scmp.ne.s32.totalorder %s21, %s24
    %p33 = scmp.eq.s32.totalorder %s16, 5
    %p34 = por %p32, %p33
    %p35 = scmp.ne.s32.totalorder %s24, %s25
    %p36 = scmp.eq.s32.totalorder %s16, 0
    %p37 = por %p35, %p36
    %p38 = scmp.ne.s32.totalorder %s24, %s25
    %p39 = scmp.eq.s32.totalorder %s17, 5
    %p40 = por %p38, %p39
    %p42 = scmp.ne.s32.totalorder %s25, %s41
    %p43 = scmp.eq.s32.totalorder %s17, 0
    %p44 = por %p42, %p43
    %s46 = sadd.s32 %s45, 1
    %p49 = scmp.eq.s32.totalorder %s11, 5
    %p50 = scmp.ne.s32.totalorder %s45, %s47
    %p51 = scmp.eq.s32.totalorder %s11, 0
    %p52 = por %p50, %p51
    %p53 = scmp.ne.s32.totalorder %s45, %s47
    %p54 = scmp.eq.s32.totalorder %s16, 5
    %p55 = por %p53, %p54
    %p56 = scmp.ne.s32.totalorder %s47, %s48
    %p57 = scmp.eq.s32.totalorder %s16, 0
    %p58 = por %p56, %p57
    %p59 = scmp.ne.s32.totalorder %s47, %s48
    %p60 = scmp.eq.s32.totalorder %s17, 5
    %p61 = por %p59, %p60
    %p63 = scmp.ne.s32.totalorder %s48, %s62
    %p64 = scmp.eq.s32.totalorder %s17, 0
    %p65 = por %p63, %p64
    %s67 = sadd.s32 %s66, 1
    %p70 = scmp.eq.s32.totalorder %s11, 5
    %p71 = scmp.ne.s32.totalorder %s66, %s68
    %p72 = scmp.eq.s32.totalorder %s11, 0
    %p73 = por %p71, %p72
    %p74 = scmp.ne.s32.totalorder %s66, %s68
    %p75 = scmp.eq.s32.totalorder %s16, 5
    %p76 = por %p74, %p75
    %p77 = scmp.ne.s32.totalorder %s68, %s69
    %p78 = scmp.eq.s32.totalorder %s16, 0
    %p79 = por %p77, %p78
    %p80 = scmp.ne.s32.totalorder %s68, %s69
    %p81 = scmp.eq.s32.totalorder %s17, 5
    %p82 = por %p80, %p81
    %p84 = scmp.ne.s32.totalorder %s69, %s83
    %p85 = scmp.eq.s32.totalorder %s17, 0
    %p86 = por %p84, %p85
    %s87 = ssub.s32 %s11, %s18
    %p88 = scmp.eq.s32.totalorder %s87, 0
    %s90 = sadd.s32 %s89, 1
    %s91 = scalar_select %p88, %s89, %s90
    %p94 = pneg %p88
    %p95 = scmp.eq.s32.totalorder %s11, 5
    %p96 = por %p94, %p95
    %p97 = scmp.ne.s32.totalorder %s89, %s92
    %p98 = scmp.eq.s32.totalorder %s11, 0
    %p99 = por %p97, %p98
    %p100 = scmp.ne.s32.totalorder %s89, %s92
    %p101 = scmp.eq.s32.totalorder %s16, 5
    %p102 = por %p100, %p101
    %p103 = scmp.ne.s32.totalorder %s92, %s93
    %p104 = scmp.eq.s32.totalorder %s16, 0
    %p105 = por %p103, %p104
    %p106 = scmp.ne.s32.totalorder %s92, %s93
    %p107 = scmp.eq.s32.totalorder %s17, 5
    %p108 = por %p106, %p107
    %p110 = scmp.ne.s32.totalorder %s93, %s109
    %p111 = scmp.eq.s32.totalorder %s17, 0
    %p112 = por %p110, %p111
    %s113 = ssub.s32 %s11, %s18
    %p114 = scmp.eq.s32.totalorder %s113, 0
    %s116 = sadd.s32 %s115, 1
    %s117 = scalar_select %p114, %s115, %s116
    %p120 = pneg %p114
    %p121 = scmp.eq.s32.totalorder %s11, 5
    %p122 = por %p120, %p121
    %p123 = scmp.ne.s32.totalorder %s115, %s118
    %p124 = scmp.eq.s32.totalorder %s11, 0
    %p125 = por %p123, %p124
    %p126 = scmp.ne.s32.totalorder %s115, %s118
    %p127 = scmp.eq.s32.totalorder %s16, 5
    %p128 = por %p126, %p127
    %p129 = scmp.ne.s32.totalorder %s118, %s119
    %p130 = scmp.eq.s32.totalorder %s16, 0
    %p131 = por %p129, %p130
    %p132 = scmp.ne.s32.totalorder %s118, %s119
    %p133 = scmp.eq.s32.totalorder %s17, 5
    %p134 = por %p132, %p133
    %p136 = scmp.ne.s32.totalorder %s119, %s135
    %p137 = scmp.eq.s32.totalorder %s17, 0
    %p138 = por %p136, %p137
    %p139 = scmp.le.s32.totalorder 1, %s11
    %p140 = scmp.lt.s32.totalorder %s11, 7
    %p141 = pnand %p139, %p140
    %p142 = pneg %p141
    // Predicated region
    $region9: #{combine_heads_forward.3} parent=5 // pred_check
      _
    $region10: #{combine_heads_forward.3} parent=5 // pred_check_branch
      %144 = sbr.rel (%p141) target = $region12
    $region11: #{combine_heads_forward.3} parent=5 // pred_region
      %s145 = ssub.s32 %s11, 1
      // Predicated region
      $region13: #{combine_heads_forward.3} parent=11 // pred_check
        %p146 = pneg %p58
      $region14: #{combine_heads_forward.3} parent=11 // pred_check_branch
        %148 = sbr.rel (%p146) target = $region16
      $region15: #{combine_heads_forward.3} parent=11 // pred_region
        _
      $region16: #{combine_heads_forward.3} parent=11 // pred_fallthru
        _
      // Predicated region
      $region17: #{combine_heads_forward.3} parent=11 // pred_check
        %p149 = pneg %p79
      $region18: #{combine_heads_forward.3} parent=11 // pred_check_branch
        %151 = sbr.rel (%p149) target = $region20
      $region19: #{combine_heads_forward.3} parent=11 // pred_region
        _
      $region20: #{combine_heads_forward.3} parent=11 // pred_fallthru
        _
    $region12: #{combine_heads_forward.3} parent=5 // pred_fallthru
      _
    %p152 = scmp.lt.s32.totalorder %s11, 6
    // Predicated region
    $region21: #{combine_heads_forward.3} parent=5 // pred_check
      %p153 = pneg %p152
    $region22: #{combine_heads_forward.3} parent=5 // pred_check_branch
      %155 = sbr.rel (%p153) target = $region24
    $region23: #{combine_heads_forward.3} parent=5 // pred_region
      // Predicated region
      $region25: #{combine_heads_forward.3} parent=23 // pred_check
        %p156 = pneg %p31
      $region26: #{combine_heads_forward.3} parent=23 // pred_check_branch
        %158 = sbr.rel (%p156) target = $region28
      $region27: #{combine_heads_forward.3} parent=23 // pred_region
        %s159 = smul.u32 2, %s11
        %p160 = scmp.lt.s32.totalorder %s159, 11
        %s161 = scalar_select %p160, %s159, 11
        %s162 = smul.addr %s161, 8
        %s163 = scalar_lea.vmem %s0, %s162
        %s164 = smul.u32 2, %s11
      $region28: #{combine_heads_forward.3} parent=23 // pred_fallthru
        _
    $region24: #{combine_heads_forward.3} parent=5 // pred_fallthru
      _
    %p165 = scmp.le.s32.totalorder 1, %s11
    %p166 = scmp.lt.s32.totalorder %s11, 7
    %p167 = pnand %p165, %p166
    %p168 = pneg %p167
    // Predicated region
    $region29: #{combine_heads_forward.3} parent=5 // pred_check
      _
    $region30: #{combine_heads_forward.3} parent=5 // pred_check_branch
      %170 = sbr.rel (%p167) target = $region32
    $region31: #{combine_heads_forward.3} parent=5 // pred_region
      %s171 = ssub.s32 %s11, 1
      %s172 = smul.u32 2, %s16
      %p173 = scmp.lt.s32.totalorder %s172, 11
      %s174 = scalar_select %p173, %s172, 11
      %s175 = smul.addr %s174, 8
      %s176 = scalar_lea.vmem %s0, %s175
      %p177 = pneg %p37
      %p178 = pneg %p34
      %p179 = pneg %p58
      %p180 = pneg %p55
      %p181 = pneg %p79
      %p182 = pneg %p76
      %p183 = pneg %p105
      %p184 = pneg %p102
      %s185 = smul.u32 2, %s16
      %p186 = scmp.lt.s32.totalorder %s185, 11
      %s187 = scalar_select %p186, %s185, 11
      %s188 = smul.addr %s187, 8
      %s189 = scalar_lea.vmem %s3, %s188
      %p190 = pneg %p131
      %p191 = pneg %p128
      %p192 = scmp.lt.s32.totalorder %s16, 5
      %s193 = scalar_select %p192, %s16, 5
      %s194 = smul.addr %s193, 2
      %s195 = scalar_lea.vmem %s4, %s194
      %s196 = smul.u32 2, %s16
      %p197 = scmp.lt.s32.totalorder %s196, 11
      %s198 = scalar_select %p197, %s196, 11
      %s199 = smul.addr %s198, 8
      %s200 = scalar_lea.vmem %s0, %s199
      %s201 = smul.u32 2, %s16
      %s202 = smul.u32 2, %s16
      %p203 = scmp.lt.s32.totalorder %s202, 11
      %s204 = scalar_select %p203, %s202, 11
      %s205 = smul.addr %s204, 8
      %s206 = scalar_lea.vmem %s3, %s205
      %s207 = smul.u32 2, %s16
      %p208 = scmp.lt.s32.totalorder %s16, 5
      %s209 = scalar_select %p208, %s16, 5
      %s210 = smul.addr %s209, 2
      %s211 = scalar_lea.vmem %s4, %s210
      %v212 = vld [vmem:[%s200] sm:$0xff]
      %v213 = vld [vmem:[%s200 + $0x8] sm:$0xff]
      %v214 = vlaneseq
      %v215 = vshrl.u32 %v214, 7
      %v216 = vadd.s32 %v215, 8
      %vm217 = vcmp.lt.s32.totalorder %v215, 0
      %v218 = vsub.s32 0, %v215
      %v219 = vsel %vm217, %v218, %v215
      %v220 = vshrl.u32 %v219, 4
      %v221 = vand.u32 %v219, 15
      %v222 = vsub.s32 0, %v221
      %v223 = vsel %vm217, %v222, %v221
      %vm224 = vcmp.lt.s32.totalorder %v216, 0
      %v225 = vsub.s32 0, %v216
      %v226 = vsel %vm224, %v225, %v216
      %v227 = vshrl.u32 %v226, 4
      %v228 = vand.u32 %v226, 15
      %v229 = vsub.s32 0, %v228
      %v230 = vsel %vm224, %v229, %v228
      %vm231 = vcmp.ne.s32.totalorder %v223, 0
      %vm232 = vcmp.ne.s32.totalorder %v230, 0
      %vm233 = vcmp.lt.s32.totalorder %v223, 0
      %vm234 = vcmp.lt.s32.totalorder %v230, 0
      %vm235 = vmand %vm233, %vm231
      %vm236 = vmand %vm234, %vm232
      %v237 = vadd.s32 %v223, 16
      %v238 = vadd.s32 %v230, 16
      %v239 = vsel %vm235, %v237, %v223
      %v240 = vsel %vm236, %v238, %v230
      %vm241 = vcmp.ne.s32.totalorder %v239, 0
      %vm242 = vcmp.ne.s32.totalorder %v240, 0
      %vm243 = vcmp.ne.s32.totalorder %v239, 15
      %vm244 = vcmp.ne.s32.totalorder %v240, 15
      %v245 = vrot.slane %v212, 7
      %v246 = vrot.slane %v213, 7
      %vm247 = vcmp.lt.s32.totalorder %v215, 1
      %v248 = vsel %vm247, %v245, %v246
      %v249 = vsel %vm247, %v246, %v245
      %v250 = vsel %vm241, 1, 0
      %v251 = vsel %vm242, 1, 0
      %vm252 = vcmp.eq.s32.totalorder %v250, 1
      %vm253 = vcmp.eq.s32.totalorder %v251, 1
      %v254 = vsel %vm252, %v249, 0.0
      %v255 = vsel %vm253, %v248, 0.0
      %v256 = vrot.slane %v212, 1
      %v257 = vrot.slane %v213, 1
      %vm258 = vcmp.lt.s32.totalorder %v215, 7
      %v259 = vsel %vm258, %v256, %v257
      %v260 = vsel %vm258, %v257, %v256
      %v261 = vsel %vm243, 1, 0
      %v262 = vsel %vm244, 1, 0
      %vm263 = vcmp.eq.s32.totalorder %v261, 1
      %vm264 = vcmp.eq.s32.totalorder %v262, 1
      %v265 = vsel %vm263, %v259, 0.0
      %v266 = vsel %vm264, %v260, 0.0
      %v267 = vpack.c.bf16 %v255, %v254
      %v268 = vpack.c.bf16 %v213, %v212
      %v269 = vpack.c.bf16 %v266, %v265
      %v270 = vld [vmem:[%s1] sm:$0xf]
      %v271 = vld [vmem:[%s1 + $0x4] sm:$0xf]
      %v272 = vld [vmem:[%s1 + $0x8] sm:$0xf]
      %v273 = vld [vmem:[%s1 + $0xc] sm:$0xf]
      %v274 = vld [vmem:[%s1 + $0x10] sm:$0xf]
      %v275 = vld [vmem:[%s1 + $0x14] sm:$0xf]
      %v276 = vld [vmem:[%s1 + $0x18] sm:$0xf]
      %v277 = vld [vmem:[%s1 + $0x1c] sm:$0xf]
      %v278 = vld [vmem:[%s1 + $0x20] sm:$0xf]
      %v279 = vld [vmem:[%s1 + $0x24] sm:$0xf]
      %v280 = vld [vmem:[%s1 + $0x28] sm:$0xf]
      %v281 = vld [vmem:[%s1 + $0x2c] sm:$0xf]
      %v282 = vld [vmem:[%s1 + $0x30] sm:$0xf]
      %v283 = vld [vmem:[%s1 + $0x34] sm:$0xf]
      %v284 = vld [vmem:[%s1 + $0x38] sm:$0xf]
      %v285 = vld [vmem:[%s1 + $0x3c] sm:$0xf]
      %v286 = vld [vmem:[%s1 + $0x40] sm:$0xf]
      %v287 = vld [vmem:[%s1 + $0x44] sm:$0xf]
      %v288 = vld [vmem:[%s1 + $0x48] sm:$0xf]
      %v289 = vld [vmem:[%s1 + $0x4c] sm:$0xf]
      %v290 = vld [vmem:[%s1 + $0x50] sm:$0xf]
      %v291 = vld [vmem:[%s1 + $0x54] sm:$0xf]
      %v292 = vld [vmem:[%s1 + $0x58] sm:$0xf]
      %v293 = vld [vmem:[%s1 + $0x5c] sm:$0xf]
      %v294 = vld [vmem:[%s1 + $0x60] sm:$0xf]
      %v295 = vld [vmem:[%s1 + $0x64] sm:$0xf]
      %v296 = vld [vmem:[%s1 + $0x68] sm:$0xf]
      %v297 = vld [vmem:[%s1 + $0x6c] sm:$0xf]
      %v298 = vld [vmem:[%s1 + $0x70] sm:$0xf]
      %v299 = vld [vmem:[%s1 + $0x74] sm:$0xf]
      %v300 = vld [vmem:[%s1 + $0x78] sm:$0xf]
      %v301 = vld [vmem:[%s1 + $0x7c] sm:$0xf]
      %v302 = vld [vmem:[%s1 + $0x80] sm:$0xf]
      %v303 = vld [vmem:[%s1 + $0x84] sm:$0xf]
      %v304 = vld [vmem:[%s1 + $0x88] sm:$0xf]
      %v305 = vld [vmem:[%s1 + $0x8c] sm:$0xf]
      %v306 = vld [vmem:[%s1 + $0x90] sm:$0xf]
      %v307 = vld [vmem:[%s1 + $0x94] sm:$0xf]
      %v308 = vld [vmem:[%s1 + $0x98] sm:$0xf]
      %v309 = vld [vmem:[%s1 + $0x9c] sm:$0xf]
      %v310 = vld [vmem:[%s1 + $0xa0] sm:$0xf]
      %v311 = vld [vmem:[%s1 + $0xa4] sm:$0xf]
      %v312 = vld [vmem:[%s1 + $0xa8] sm:$0xf]
      %v313 = vld [vmem:[%s1 + $0xac] sm:$0xf]
      %v314 = vld [vmem:[%s1 + $0xb0] sm:$0xf]
      %v315 = vld [vmem:[%s1 + $0xb4] sm:$0xf]
      %v316 = vld [vmem:[%s1 + $0xb8] sm:$0xf]
      %v317 = vld [vmem:[%s1 + $0xbc] sm:$0xf]
      %v366 = vunpack.c.l.b16 %v270
      %v367 = vunpack.c.l.b16 %v271
      %v368 = vunpack.c.l.b16 %v272
      %v369 = vunpack.c.l.b16 %v273
      %v370 = vunpack.c.l.b16 %v274
      %v371 = vunpack.c.l.b16 %v275
      %v372 = vunpack.c.l.b16 %v276
      %v373 = vunpack.c.l.b16 %v277
      %v374 = vunpack.c.l.b16 %v278
      %v375 = vunpack.c.l.b16 %v279
      %v376 = vunpack.c.l.b16 %v280
      %v377 = vunpack.c.l.b16 %v281
      %v378 = vunpack.c.l.b16 %v282
      %v379 = vunpack.c.l.b16 %v283
      %v380 = vunpack.c.l.b16 %v284
      %v381 = vunpack.c.l.b16 %v285
      %v382 = vunpack.c.l.b16 %v286
      %v383 = vunpack.c.l.b16 %v287
      %v384 = vunpack.c.l.b16 %v288
      %v385 = vunpack.c.l.b16 %v289
      %v386 = vunpack.c.l.b16 %v290
      %v387 = vunpack.c.l.b16 %v291
      %v388 = vunpack.c.l.b16 %v292
      %v389 = vunpack.c.l.b16 %v293
      %v390 = vunpack.c.l.b16 %v294
      %v391 = vunpack.c.l.b16 %v295
      %v392 = vunpack.c.l.b16 %v296
      %v393 = vunpack.c.l.b16 %v297
      %v394 = vunpack.c.l.b16 %v298
      %v395 = vunpack.c.l.b16 %v299
      %v396 = vunpack.c.l.b16 %v300
      %v397 = vunpack.c.l.b16 %v301
      %v398 = vunpack.c.l.b16 %v302
      %v399 = vunpack.c.l.b16 %v303
      %v400 = vunpack.c.l.b16 %v304
      %v401 = vunpack.c.l.b16 %v305
      %v402 = vunpack.c.l.b16 %v306
      %v403 = vunpack.c.l.b16 %v307
      %v404 = vunpack.c.l.b16 %v308
      %v405 = vunpack.c.l.b16 %v309
      %v406 = vunpack.c.l.b16 %v310
      %v407 = vunpack.c.l.b16 %v311
      %v408 = vunpack.c.l.b16 %v312
      %v409 = vunpack.c.l.b16 %v313
      %v410 = vunpack.c.l.b16 %v314
      %v411 = vunpack.c.l.b16 %v315
      %v412 = vunpack.c.l.b16 %v316
      %v413 = vunpack.c.l.b16 %v317
      %v414 = vpack.c.b16 %v367, %v366
      %v415 = vpack.c.b16 %v369, %v368
      %v416 = vpack.c.b16 %v371, %v370
      %v417 = vpack.c.b16 %v373, %v372
      %v418 = vpack.c.b16 %v375, %v374
      %v419 = vpack.c.b16 %v377, %v376
      %v420 = vpack.c.b16 %v379, %v378
      %v421 = vpack.c.b16 %v381, %v380
      %v422 = vpack.c.b16 %v383, %v382
      %v423 = vpack.c.b16 %v385, %v384
      %v424 = vpack.c.b16 %v387, %v386
      %v425 = vpack.c.b16 %v389, %v388
      %v426 = vpack.c.b16 %v391, %v390
      %v427 = vpack.c.b16 %v393, %v392
      %v428 = vpack.c.b16 %v395, %v394
      %v429 = vpack.c.b16 %v397, %v396
      %v430 = vpack.c.b16 %v399, %v398
      %v431 = vpack.c.b16 %v401, %v400
      %v432 = vpack.c.b16 %v403, %v402
      %v433 = vpack.c.b16 %v405, %v404
      %v434 = vpack.c.b16 %v407, %v406
      %v435 = vpack.c.b16 %v409, %v408
      %v436 = vpack.c.b16 %v411, %v410
      %v437 = vpack.c.b16 %v413, %v412
      %462 = vmatpush.bf16.msra.mxu0 %v421
      %463 = vmatpush.bf16.msra.mxu0 %v420
      %464 = vmatpush.bf16.msra.mxu0 %v419
      %465 = vmatpush.bf16.msra.mxu0 %v418
      %466 = vmatpush.bf16.msra.mxu0 %v417
      %467 = vmatpush.bf16.msra.mxu0 %v416
      %468 = vmatpush.bf16.msra.mxu0 %v415
      %469 = vmatpush.bf16.msra.mxu0 %v414
      %470 = vmatmul.bf16.gmra.mxu0 %v267
      %v471 = vpop.f32.mrf.mxu0
      %v472 = vadd.f32 0.0, %v471
      %v473 = vpop.f32.mrf.mxu0
      %v474 = vadd.f32 0.0, %v473
      %475 = vdwg.mxu0
      %476 = vmatpush.bf16.msra.mxu0 %v429
      %477 = vmatpush.bf16.msra.mxu0 %v428
      %478 = vmatpush.bf16.msra.mxu0 %v427
      %479 = vmatpush.bf16.msra.mxu0 %v426
      %480 = vmatpush.bf16.msra.mxu0 %v425
      %481 = vmatpush.bf16.msra.mxu0 %v424
      %482 = vmatpush.bf16.msra.mxu0 %v423
      %483 = vmatpush.bf16.msra.mxu0 %v422
      %484 = vmatmul.bf16.gmra.mxu0 %v268
      %v485 = vpop.f32.mrf.mxu0
      %v486 = vadd.f32 %v472, %v485
      %v487 = vpop.f32.mrf.mxu0
      %v488 = vadd.f32 %v474, %v487
      %489 = vdwg.mxu0
      %490 = vmatpush.bf16.msra.mxu0 %v437
      %491 = vmatpush.bf16.msra.mxu0 %v436
      %492 = vmatpush.bf16.msra.mxu0 %v435
      %493 = vmatpush.bf16.msra.mxu0 %v434
      %494 = vmatpush.bf16.msra.mxu0 %v433
      %495 = vmatpush.bf16.msra.mxu0 %v432
      %496 = vmatpush.bf16.msra.mxu0 %v431
      %497 = vmatpush.bf16.msra.mxu0 %v430
      %498 = vmatmul.bf16.gmra.mxu0 %v269
      %v499 = vpop.f32.mrf.mxu0
      %v500 = vadd.f32 %v486, %v499
      %v501 = vpop.f32.mrf.mxu0
      %v502 = vadd.f32 %v488, %v501
      %503 = vdwg.mxu0
      %v504 = vrot.slane %v500, 7
      %v505 = vrot.slane %v502, 7
      %v506 = vsel %vm247, %v504, %v505
      %v507 = vsel %vm247, %v505, %v504
      %v508 = vsel %vm252, %v507, 0.0
      %v509 = vsel %vm253, %v506, 0.0
      %v510 = vrot.slane %v500, 1
      %v511 = vrot.slane %v502, 1
      %v512 = vsel %vm258, %v510, %v511
      %v513 = vsel %vm258, %v511, %v510
      %v514 = vsel %vm263, %v512, 0.0
      %v515 = vsel %vm264, %v513, 0.0
      %v516 = vpack.c.bf16 %v509, %v508
      %v517 = vpack.c.bf16 %v502, %v500
      %v518 = vpack.c.bf16 %v515, %v514
      %v519 = vld [vmem:[%s2] sm:$0xf]
      %v520 = vld [vmem:[%s2 + $0x4] sm:$0xf]
      %v521 = vld [vmem:[%s2 + $0x8] sm:$0xf]
      %v522 = vld [vmem:[%s2 + $0xc] sm:$0xf]
      %v523 = vld [vmem:[%s2 + $0x10] sm:$0xf]
      %v524 = vld [vmem:[%s2 + $0x14] sm:$0xf]
      %v525 = vld [vmem:[%s2 + $0x18] sm:$0xf]
      %v526 = vld [vmem:[%s2 + $0x1c] sm:$0xf]
      %v527 = vld [vmem:[%s2 + $0x20] sm:$0xf]
      %v528 = vld [vmem:[%s2 + $0x24] sm:$0xf]
      %v529 = vld [vmem:[%s2 + $0x28] sm:$0xf]
      %v530 = vld [vmem:[%s2 + $0x2c] sm:$0xf]
      %v531 = vld [vmem:[%s2 + $0x30] sm:$0xf]
      %v532 = vld [vmem:[%s2 + $0x34] sm:$0xf]
      %v533 = vld [vmem:[%s2 + $0x38] sm:$0xf]
      %v534 = vld [vmem:[%s2 + $0x3c] sm:$0xf]
      %v535 = vld [vmem:[%s2 + $0x40] sm:$0xf]
      %v536 = vld [vmem:[%s2 + $0x44] sm:$0xf]
      %v537 = vld [vmem:[%s2 + $0x48] sm:$0xf]
      %v538 = vld [vmem:[%s2 + $0x4c] sm:$0xf]
      %v539 = vld [vmem:[%s2 + $0x50] sm:$0xf]
      %v540 = vld [vmem:[%s2 + $0x54] sm:$0xf]
      %v541 = vld [vmem:[%s2 + $0x58] sm:$0xf]
      %v542 = vld [vmem:[%s2 + $0x5c] sm:$0xf]
      %v543 = vld [vmem:[%s2 + $0x60] sm:$0xf]
      %v544 = vld [vmem:[%s2 + $0x64] sm:$0xf]
      %v545 = vld [vmem:[%s2 + $0x68] sm:$0xf]
      %v546 = vld [vmem:[%s2 + $0x6c] sm:$0xf]
      %v547 = vld [vmem:[%s2 + $0x70] sm:$0xf]
      %v548 = vld [vmem:[%s2 + $0x74] sm:$0xf]
      %v549 = vld [vmem:[%s2 + $0x78] sm:$0xf]
      %v550 = vld [vmem:[%s2 + $0x7c] sm:$0xf]
      %v551 = vld [vmem:[%s2 + $0x80] sm:$0xf]
      %v552 = vld [vmem:[%s2 + $0x84] sm:$0xf]
      %v553 = vld [vmem:[%s2 + $0x88] sm:$0xf]
      %v554 = vld [vmem:[%s2 + $0x8c] sm:$0xf]
      %v555 = vld [vmem:[%s2 + $0x90] sm:$0xf]
      %v556 = vld [vmem:[%s2 + $0x94] sm:$0xf]
      %v557 = vld [vmem:[%s2 + $0x98] sm:$0xf]
      %v558 = vld [vmem:[%s2 + $0x9c] sm:$0xf]
      %v559 = vld [vmem:[%s2 + $0xa0] sm:$0xf]
      %v560 = vld [vmem:[%s2 + $0xa4] sm:$0xf]
      %v561 = vld [vmem:[%s2 + $0xa8] sm:$0xf]
      %v562 = vld [vmem:[%s2 + $0xac] sm:$0xf]
      %v563 = vld [vmem:[%s2 + $0xb0] sm:$0xf]
      %v564 = vld [vmem:[%s2 + $0xb4] sm:$0xf]
      %v565 = vld [vmem:[%s2 + $0xb8] sm:$0xf]
      %v566 = vld [vmem:[%s2 + $0xbc] sm:$0xf]
      %v615 = vunpack.c.l.b16 %v519
      %v616 = vunpack.c.l.b16 %v520
      %v617 = vunpack.c.l.b16 %v521
      %v618 = vunpack.c.l.b16 %v522
      %v619 = vunpack.c.l.b16 %v523
      %v620 = vunpack.c.l.b16 %v524
      %v621 = vunpack.c.l.b16 %v525
      %v622 = vunpack.c.l.b16 %v526
      %v623 = vunpack.c.l.b16 %v527
      %v624 = vunpack.c.l.b16 %v528
      %v625 = vunpack.c.l.b16 %v529
      %v626 = vunpack.c.l.b16 %v530
      %v627 = vunpack.c.l.b16 %v531
      %v628 = vunpack.c.l.b16 %v532
      %v629 = vunpack.c.l.b16 %v533
      %v630 = vunpack.c.l.b16 %v534
      %v631 = vunpack.c.l.b16 %v535
      %v632 = vunpack.c.l.b16 %v536
      %v633 = vunpack.c.l.b16 %v537
      %v634 = vunpack.c.l.b16 %v538
      %v635 = vunpack.c.l.b16 %v539
      %v636 = vunpack.c.l.b16 %v540
      %v637 = vunpack.c.l.b16 %v541
      %v638 = vunpack.c.l.b16 %v542
      %v639 = vunpack.c.l.b16 %v543
      %v640 = vunpack.c.l.b16 %v544
      %v641 = vunpack.c.l.b16 %v545
      %v642 = vunpack.c.l.b16 %v546
      %v643 = vunpack.c.l.b16 %v547
      %v644 = vunpack.c.l.b16 %v548
      %v645 = vunpack.c.l.b16 %v549
      %v646 = vunpack.c.l.b16 %v550
      %v647 = vunpack.c.l.b16 %v551
      %v648 = vunpack.c.l.b16 %v552
      %v649 = vunpack.c.l.b16 %v553
      %v650 = vunpack.c.l.b16 %v554
      %v651 = vunpack.c.l.b16 %v555
      %v652 = vunpack.c.l.b16 %v556
      %v653 = vunpack.c.l.b16 %v557
      %v654 = vunpack.c.l.b16 %v558
      %v655 = vunpack.c.l.b16 %v559
      %v656 = vunpack.c.l.b16 %v560
      %v657 = vunpack.c.l.b16 %v561
      %v658 = vunpack.c.l.b16 %v562
      %v659 = vunpack.c.l.b16 %v563
      %v660 = vunpack.c.l.b16 %v564
      %v661 = vunpack.c.l.b16 %v565
      %v662 = vunpack.c.l.b16 %v566
      %v663 = vpack.c.b16 %v616, %v615
      %v664 = vpack.c.b16 %v618, %v617
      %v665 = vpack.c.b16 %v620, %v619
      %v666 = vpack.c.b16 %v622, %v621
      %v667 = vpack.c.b16 %v624, %v623
      %v668 = vpack.c.b16 %v626, %v625
      %v669 = vpack.c.b16 %v628, %v627
      %v670 = vpack.c.b16 %v630, %v629
      %v671 = vpack.c.b16 %v632, %v631
      %v672 = vpack.c.b16 %v634, %v633
      %v673 = vpack.c.b16 %v636, %v635
      %v674 = vpack.c.b16 %v638, %v637
      %v675 = vpack.c.b16 %v640, %v639
      %v676 = vpack.c.b16 %v642, %v641
      %v677 = vpack.c.b16 %v644, %v643
      %v678 = vpack.c.b16 %v646, %v645
      %v679 = vpack.c.b16 %v648, %v647
      %v680 = vpack.c.b16 %v650, %v649
      %v681 = vpack.c.b16 %v652, %v651
      %v682 = vpack.c.b16 %v654, %v653
      %v683 = vpack.c.b16 %v656, %v655
      %v684 = vpack.c.b16 %v658, %v657
      %v685 = vpack.c.b16 %v660, %v659
      %v686 = vpack.c.b16 %v662, %v661
      %711 = vmatpush.bf16.msra.mxu0 %v670
      %712 = vmatpush.bf16.msra.mxu0 %v669
      %713 = vmatpush.bf16.msra.mxu0 %v668
      %714 = vmatpush.bf16.msra.mxu0 %v667
      %715 = vmatpush.bf16.msra.mxu0 %v666
      %716 = vmatpush.bf16.msra.mxu0 %v665
      %717 = vmatpush.bf16.msra.mxu0 %v664
      %718 = vmatpush.bf16.msra.mxu0 %v663
      %719 = vmatmul.bf16.gmra.mxu0 %v516
      %v720 = vpop.f32.mrf.mxu0
      %v721 = vadd.f32 0.0, %v720
      %v722 = vpop.f32.mrf.mxu0
      %v723 = vadd.f32 0.0, %v722
      %724 = vdwg.mxu0
      %725 = vmatpush.bf16.msra.mxu0 %v678
      %726 = vmatpush.bf16.msra.mxu0 %v677
      %727 = vmatpush.bf16.msra.mxu0 %v676
      %728 = vmatpush.bf16.msra.mxu0 %v675
      %729 = vmatpush.bf16.msra.mxu0 %v674
      %730 = vmatpush.bf16.msra.mxu0 %v673
      %731 = vmatpush.bf16.msra.mxu0 %v672
      %732 = vmatpush.bf16.msra.mxu0 %v671
      %733 = vmatmul.bf16.gmra.mxu0 %v517
      %v734 = vpop.f32.mrf.mxu0
      %v735 = vadd.f32 %v721, %v734
      %v736 = vpop.f32.mrf.mxu0
      %v737 = vadd.f32 %v723, %v736
      %738 = vdwg.mxu0
      %739 = vmatpush.bf16.msra.mxu0 %v686
      %740 = vmatpush.bf16.msra.mxu0 %v685
      %741 = vmatpush.bf16.msra.mxu0 %v684
      %742 = vmatpush.bf16.msra.mxu0 %v683
      %743 = vmatpush.bf16.msra.mxu0 %v682
      %744 = vmatpush.bf16.msra.mxu0 %v681
      %745 = vmatpush.bf16.msra.mxu0 %v680
      %746 = vmatpush.bf16.msra.mxu0 %v679
      %747 = vmatmul.bf16.gmra.mxu0 %v518
      %v748 = vpop.f32.mrf.mxu0
      %v749 = vadd.f32 %v735, %v748
      %v750 = vpop.f32.mrf.mxu0
      %v751 = vadd.f32 %v737, %v750
      %752 = vdwg.mxu0
      %753 = vst [vmem:[%s206] sm:$0xff] %v749
      %754 = vst [vmem:[%s206 + $0x8] sm:$0xff] %v751
      %v755 = vadd.f32 %v749, %v751
      %v756 = vrot.slane %v755, 4
      %v757 = vadd.f32 %v755, %v756
      %v758 = vrot.slane %v757, 2
      %v759 = vadd.f32 %v757, %v758
      %v760 = vrot.slane %v759, 1
      %v761 = vadd.f32 %v759, %v760
      %v762 = vmul.f32 %v761, 0.0625
      %v763 = vsub.f32 %v749, %v762
      %v764 = vsub.f32 %v751, %v762
      %v765 = vmul.f32 %v763, %v763
      %v766 = vmul.f32 %v764, %v764
      %v767 = vadd.f32 %v765, %v766
      %v768 = vrot.slane %v767, 4
      %v769 = vadd.f32 %v767, %v768
      %v770 = vrot.slane %v769, 2
      %v771 = vadd.f32 %v769, %v770
      %v772 = vrot.slane %v771, 1
      %v773 = vadd.f32 %v771, %v772
      %vm774 = vcmask 1040384
      %v775 = vsel %vm774, %v761, %v773
      %776 = vst [vmem:[%s211] sm:$0x3] %v775
      %s777 = smul.u32 2, %s16
      %p778 = scmp.lt.s32.totalorder %s777, 11
      %s779 = scalar_select %p778, %s777, 11
      %s780 = smul.addr %s779, 8
      %s781 = scalar_lea.vmem %s3, %s780
      %p782 = scmp.lt.s32.totalorder %s16, 5
      %s783 = scalar_select %p782, %s16, 5
      %s784 = smul.addr %s783, 2
      %s785 = scalar_lea.vmem %s4, %s784
      // Predicated region
      $region33: #{combine_heads_forward.3} parent=31 // pred_check
        %p786 = pneg %p102
      $region34: #{combine_heads_forward.3} parent=31 // pred_check_branch
        %788 = sbr.rel (%p786) target = $region36
      $region35: #{combine_heads_forward.3} parent=31 // pred_region
        %s789 = smul.u32 2, %s16
      $region36: #{combine_heads_forward.3} parent=31 // pred_fallthru
        _
      // Predicated region
      $region37: #{combine_heads_forward.3} parent=31 // pred_check
        %p790 = pneg %p128
      $region38: #{combine_heads_forward.3} parent=31 // pred_check_branch
        %792 = sbr.rel (%p790) target = $region40
      $region39: #{combine_heads_forward.3} parent=31 // pred_region
        _
      $region40: #{combine_heads_forward.3} parent=31 // pred_fallthru
        _
    $region32: #{combine_heads_forward.3} parent=5 // pred_fallthru
      _
    %p793 = scmp.le.s32.totalorder 2, %s11
    // Predicated region
    $region41: #{combine_heads_forward.3} parent=5 // pred_check
      %p794 = pneg %p793
    $region42: #{combine_heads_forward.3} parent=5 // pred_check_branch
      %796 = sbr.rel (%p794) target = $region44
    $region43: #{combine_heads_forward.3} parent=5 // pred_region
      %s797 = ssub.s32 %s11, 2
      // Predicated region
      $region45: #{combine_heads_forward.3} parent=43 // pred_check
        %p798 = pneg %p108
      $region46: #{combine_heads_forward.3} parent=43 // pred_check_branch
        %800 = sbr.rel (%p798) target = $region48
      $region47: #{combine_heads_forward.3} parent=43 // pred_region
        %s801 = smul.u32 2, %s17
        %p802 = scmp.lt.s32.totalorder %s801, 11
        %s803 = scalar_select %p802, %s801, 11
        %s804 = smul.addr %s803, 8
        %s805 = scalar_lea.vmem %s3, %s804
      $region48: #{combine_heads_forward.3} parent=43 // pred_fallthru
        _
      // Predicated region
      $region49: #{combine_heads_forward.3} parent=43 // pred_check
        %p806 = pneg %p134
      $region50: #{combine_heads_forward.3} parent=43 // pred_check_branch
        %808 = sbr.rel (%p806) target = $region52
      $region51: #{combine_heads_forward.3} parent=43 // pred_region
        %p809 = scmp.lt.s32.totalorder %s17, 5
        %s810 = scalar_select %p809, %s17, 5
        %s811 = smul.addr %s810, 2
        %s812 = scalar_lea.vmem %s4, %s811
      $region52: #{combine_heads_forward.3} parent=43 // pred_fallthru
        _
    $region44: #{combine_heads_forward.3} parent=5 // pred_fallthru
      _
  $region6: #{combine_heads_forward.3} parent=0 // loop_footer
    %s15 = sadd.s32 1, %s11
  $region7: #{combine_heads_forward.3} parent=0 // loop_footer_branch
    %10 = sbr.rel target = $region3
  $region8: #{combine_heads_forward.3} parent=0 // loop_exit
    _

// kernel: combine_heads_forward.5
$region0: #{combine_heads_forward.5}
  #allocation0 [shape = 'u32[]', space=smem, size = 0x4, offset = 0x4, fixed_abs, tag = 'smem constant byte address 0x4 - core index']
  #allocation1 [shape = 'u32[72,128]{1,0:T(1,128)}', space=vmem, size = 0x9000, scoped, tag = 'internal scratch']
  %s0 = inlined_call_operand.vmem [shape: f32[96,128], index: 0, kind: input, shape index: {}]
  %s1 = inlined_call_operand.vmem [shape: f32[1,128], index: 1, kind: input, shape index: {}]
  %s2 = inlined_call_operand.vmem [shape: f32[1,128], index: 2, kind: input, shape index: {}]
  %s3 = inlined_call_operand.hbm [shape: f32[96,128], index: 3, kind: output, shape index: {}]
  %s4 = sld [smem:[#allocation0]]
  $region45: #{combine_heads_forward.5} parent=0
    _
  %s6 = ssub.s32 1, %s4
  %s7 = scalar_select 0, %s6, %s4
  $region1: #{combine_heads_forward.5} parent=0
    #allocation2 [shape = 'u8[16384]{0}', space=vmem, size = 0x4000, scoped, tag = 'output window, operand 0']
    #allocation3 [shape = 's32[2]{0}', space=sflag, size = 0x8, scoped, tag = 'scoped memory for combine_heads_forward.5']
    %8 = vsyncpa [#allocation3], 0
    %s9 = scalar_lea.sflag [#allocation3], 1
    %10 = vsyncpa %s9, 0
    loop: start=0, step=1, limit=8
    $region2: #{combine_heads_forward.5} parent=1 // loop_pre_header
      _
    $region3: #{combine_heads_forward.5} parent=1 // loop_header
      %s12 = sphi 0, %s16
      %p13 = scmp.ge.s32.totalorder %s12, 8
      %s22 = sphi 0, %s24
      %s25 = sphi 0, %s22
      %s26 = sphi 0, %s25
      %s42 = sphi 0, %s26
      %s46 = sphi 0, %s46
      %s48 = sphi 0, %s46
      %s49 = sphi 0, %s48
      %s63 = sphi 0, %s49
      %s67 = sphi 0, %s67
      %s69 = sphi 0, %s67
      %s70 = sphi 0, %s69
      %s84 = sphi 0, %s70
      %s90 = sphi 0, %s92
      %s93 = sphi 0, %s90
      %s94 = sphi 0, %s93
      %s110 = sphi 0, %s94
    $region4: #{combine_heads_forward.5} parent=1 // loop_header_branch
      %15 = sbr.rel (%p13) target = $region8
    $region5: #{combine_heads_forward.5} parent=1 // loop_body
      %s17 = ssub.s32 %s12, 1
      %s18 = ssub.s32 %s12, 2
      %s19 = sadd.s32 %s12, 1
      %s20 = ssub.s32 %s12, %s19
      %p21 = scmp.eq.s32.totalorder %s20, 0
      %s23 = sadd.s32 %s22, 1
      %s24 = scalar_select %p21, %s22, %s23
      %p27 = pneg %p21
      %p28 = scmp.eq.s32.totalorder %s12, 5
      %p29 = por %p27, %p28
      %p30 = scmp.ne.s32.totalorder %s22, %s25
      %p31 = scmp.eq.s32.totalorder %s12, 0
      %p32 = por %p30, %p31
      %p33 = scmp.ne.s32.totalorder %s22, %s25
      %p34 = scmp.eq.s32.totalorder %s17, 5
      %p35 = por %p33, %p34
      %p36 = scmp.ne.s32.totalorder %s25, %s26
      %p37 = scmp.eq.s32.totalorder %s17, 0
      %p38 = por %p36, %p37
      %p39 = scmp.ne.s32.totalorder %s25, %s26
      %p40 = scmp.eq.s32.totalorder %s18, 5
      %p41 = por %p39, %p40
      %p43 = scmp.ne.s32.totalorder %s26, %s42
      %p44 = scmp.eq.s32.totalorder %s18, 0
      %p45 = por %p43, %p44
      %s47 = sadd.s32 %s46, 1
      %p50 = scmp.eq.s32.totalorder %s12, 5
      %p51 = scmp.ne.s32.totalorder %s46, %s48
      %p52 = scmp.eq.s32.totalorder %s12, 0
      %p53 = por %p51, %p52
      %p54 = scmp.ne.s32.totalorder %s46, %s48
      %p55 = scmp.eq.s32.totalorder %s17, 5
      %p56 = por %p54, %p55
      %p57 = scmp.ne.s32.totalorder %s48, %s49
      %p58 = scmp.eq.s32.totalorder %s17, 0
      %p59 = por %p57, %p58
      %p60 = scmp.ne.s32.totalorder %s48, %s49
      %p61 = scmp.eq.s32.totalorder %s18, 5
      %p62 = por %p60, %p61
      %p64 = scmp.ne.s32.totalorder %s49, %s63
      %p65 = scmp.eq.s32.totalorder %s18, 0
      %p66 = por %p64, %p65
      %s68 = sadd.s32 %s67, 1
      %p71 = scmp.eq.s32.totalorder %s12, 5
      %p72 = scmp.ne.s32.totalorder %s67, %s69
      %p73 = scmp.eq.s32.totalorder %s12, 0
      %p74 = por %p72, %p73
      %p75 = scmp.ne.s32.totalorder %s67, %s69
      %p76 = scmp.eq.s32.totalorder %s17, 5
      %p77 = por %p75, %p76
      %p78 = scmp.ne.s32.totalorder %s69, %s70
      %p79 = scmp.eq.s32.totalorder %s17, 0
      %p80 = por %p78, %p79
      %p81 = scmp.ne.s32.totalorder %s69, %s70
      %p82 = scmp.eq.s32.totalorder %s18, 5
      %p83 = por %p81, %p82
      %p85 = scmp.ne.s32.totalorder %s70, %s84
      %p86 = scmp.eq.s32.totalorder %s18, 0
      %p87 = por %p85, %p86
      %s88 = ssub.s32 %s12, %s19
      %p89 = scmp.eq.s32.totalorder %s88, 0
      %s91 = sadd.s32 %s90, 1
      %s92 = scalar_select %p89, %s90, %s91
      %p95 = pneg %p89
      %p96 = scmp.eq.s32.totalorder %s12, 5
      %p97 = por %p95, %p96
      %p98 = scmp.ne.s32.totalorder %s90, %s93
      %p99 = scmp.eq.s32.totalorder %s12, 0
      %p100 = por %p98, %p99
      %p101 = scmp.ne.s32.totalorder %s90, %s93
      %p102 = scmp.eq.s32.totalorder %s17, 5
      %p103 = por %p101, %p102
      %p104 = scmp.ne.s32.totalorder %s93, %s94
      %p105 = scmp.eq.s32.totalorder %s17, 0
      %p106 = por %p104, %p105
      %p107 = scmp.ne.s32.totalorder %s93, %s94
      %p108 = scmp.eq.s32.totalorder %s18, 5
      %p109 = por %p107, %p108
      %p111 = scmp.ne.s32.totalorder %s94, %s110
      %p112 = scmp.eq.s32.totalorder %s18, 0
      %p113 = por %p111, %p112
      %p114 = scmp.le.s32.totalorder 1, %s12
      %p115 = scmp.lt.s32.totalorder %s12, 7
      %p116 = pnand %p114, %p115
      %p117 = pneg %p116
      // Predicated region
      $region9: #{combine_heads_forward.5} parent=5 // pred_check
        _
      $region10: #{combine_heads_forward.5} parent=5 // pred_check_branch
        %119 = sbr.rel (%p116) target = $region12
      $region11: #{combine_heads_forward.5} parent=5 // pred_region
        %s120 = ssub.s32 %s12, 1
        // Predicated region
        $region13: #{combine_heads_forward.5} parent=11 // pred_check
          %p121 = pneg %p59
        $region14: #{combine_heads_forward.5} parent=11 // pred_check_branch
          %123 = sbr.rel (%p121) target = $region16
        $region15: #{combine_heads_forward.5} parent=11 // pred_region
          _
        $region16: #{combine_heads_forward.5} parent=11 // pred_fallthru
          _
        // Predicated region
        $region17: #{combine_heads_forward.5} parent=11 // pred_check
          %p124 = pneg %p80
        $region18: #{combine_heads_forward.5} parent=11 // pred_check_branch
          %126 = sbr.rel (%p124) target = $region20
        $region19: #{combine_heads_forward.5} parent=11 // pred_region
          _
        $region20: #{combine_heads_forward.5} parent=11 // pred_fallthru
          _
      $region12: #{combine_heads_forward.5} parent=5 // pred_fallthru
        _
      %p127 = scmp.lt.s32.totalorder %s12, 6
      // Predicated region
      $region21: #{combine_heads_forward.5} parent=5 // pred_check
        %p128 = pneg %p127
      $region22: #{combine_heads_forward.5} parent=5 // pred_check_branch
        %130 = sbr.rel (%p128) target = $region24
      $region23: #{combine_heads_forward.5} parent=5 // pred_region
        // Predicated region
        $region25: #{combine_heads_forward.5} parent=23 // pred_check
          %p131 = pneg %p32
        $region26: #{combine_heads_forward.5} parent=23 // pred_check_branch
          %133 = sbr.rel (%p131) target = $region28
        $region27: #{combine_heads_forward.5} parent=23 // pred_region
          %s134 = smul.u32 2, %s12
          %p135 = scmp.lt.s32.totalorder %s134, 11
          %s136 = scalar_select %p135, %s134, 11
          %s137 = smul.addr %s136, 8
          %s138 = scalar_lea.vmem %s0, %s137
          %s139 = smul.u32 2, %s12
        $region28: #{combine_heads_forward.5} parent=23 // pred_fallthru
          _
      $region24: #{combine_heads_forward.5} parent=5 // pred_fallthru
        _
      %p140 = scmp.le.s32.totalorder 1, %s12
      %p141 = scmp.lt.s32.totalorder %s12, 7
      %p142 = pnand %p140, %p141
      %p143 = pneg %p142
      // Predicated region
      $region29: #{combine_heads_forward.5} parent=5 // pred_check
        _
      $region30: #{combine_heads_forward.5} parent=5 // pred_check_branch
        %145 = sbr.rel (%p142) target = $region32
      $region31: #{combine_heads_forward.5} parent=5 // pred_region
        %s146 = ssub.s32 %s12, 1
        %s147 = smul.u32 2, %s17
        %p148 = scmp.lt.s32.totalorder %s147, 11
        %s149 = scalar_select %p148, %s147, 11
        %s150 = smul.addr %s149, 8
        %s151 = scalar_lea.vmem %s0, %s150
        %p152 = pneg %p38
        %p153 = pneg %p35
        %p154 = pneg %p59
        %p155 = pneg %p56
        %p156 = pneg %p80
        %p157 = pneg %p77
        %p158 = pneg %p106
        %p159 = pneg %p103
        %s160 = sand.u32 %s93, 1
        %s161 = scalar_lea.sflag [#allocation3], %s160
        %s162 = sand.u32 %s93, 1
        %s163 = smul.addr %s162, 16
        %s164 = scalar_lea.vmem [#allocation2], %s163
        %s165 = smul.u32 2, %s17
        %p166 = scmp.lt.s32.totalorder %s165, 11
        %s167 = scalar_select %p166, %s165, 11
        %s168 = smul.addr %s167, 8
        %s169 = scalar_lea.vmem %s0, %s168
        %s170 = smul.u32 2, %s17
        %s171 = smul.u32 2, %s17
        %v172 = vld [vmem:[%s169] sm:$0xff]
        %v173 = vld [vmem:[%s169 + $0x8] sm:$0xff]
        %v174 = vld [vmem:[%s1] sm:$0x1]
        %v176 = vperm.slane %v174, 0
        %v178 = vmul.f32 %v172, %v176
        %v179 = vmul.f32 %v173, %v176
        %v180 = vld [vmem:[%s2] sm:$0x1]
        %v182 = vperm.slane %v180, 0
        %v184 = vadd.f32 %v178, %v182
        %v185 = vadd.f32 %v179, %v182
        %v186 = vmul.f32 %v184, 0.2
        %v187 = vmul.f32 %v185, 0.2
        %v188 = vmax.f32 %v184, %v186
        %v189 = vmax.f32 %v185, %v187
        %190 = vst [vmem:[%s164] sm:$0xff] %v188
        %191 = vst [vmem:[%s164 + $0x8] sm:$0xff] %v189
        %s192 = sand.u32 %s93, 1
        %s193 = scalar_lea.sflag [#allocation3], %s192
        %s194 = sand.u32 %s93, 1
        %s195 = smul.addr %s194, 16
        %s196 = scalar_lea.vmem [#allocation2], %s195
        // Predicated region
        $region33: #{combine_heads_forward.5} parent=31 // pred_check
          %p197 = pneg %p103
        $region34: #{combine_heads_forward.5} parent=31 // pred_check_branch
          %199 = sbr.rel (%p197) target = $region36
        $region35: #{combine_heads_forward.5} parent=31 // pred_region
          %s200 = smul.u32 2, %s17
          %202 = vsyncadd %s193, 0
          %s203 = smul.addr %s200, 8
          %s204 = scalar_lea.hbm %s3, %s203
          %s205 = sshll.u32 %s196, 4
          %s206 = int_to_ptr.vmem [resolvable:$true] %s205
          %s207 = sshll.u32 %s204, 4
          %s208 = int_to_ptr.hbm [resolvable:$true] %s207
          %213 = dma.vmem_to_hbm [thread:$0]  %s206, 256, %s208, %s193, 128, 128, 8
        $region36: #{combine_heads_forward.5} parent=31 // pred_fallthru
          _
      $region32: #{combine_heads_forward.5} parent=5 // pred_fallthru
        _
      %p214 = scmp.le.s32.totalorder 2, %s12
      // Predicated region
      $region37: #{combine_heads_forward.5} parent=5 // pred_check
        %p215 = pneg %p214
      $region38: #{combine_heads_forward.5} parent=5 // pred_check_branch
        %217 = sbr.rel (%p215) target = $region40
      $region39: #{combine_heads_forward.5} parent=5 // pred_region
        %s218 = ssub.s32 %s12, 2
        // Predicated region
        $region41: #{combine_heads_forward.5} parent=39 // pred_check
          %p219 = pneg %p109
        $region42: #{combine_heads_forward.5} parent=39 // pred_check_branch
          %221 = sbr.rel (%p219) target = $region44
        $region43: #{combine_heads_forward.5} parent=39 // pred_region
          %s222 = sand.u32 %s94, 1
          %s223 = scalar_lea.sflag [#allocation3], %s222
          %s224 = sand.u32 %s94, 1
          %s225 = smul.addr %s224, 16
          %s226 = scalar_lea.vmem [#allocation2], %s225
          %228 = dma.done %s223, 256
        $region44: #{combine_heads_forward.5} parent=39 // pred_fallthru
          _
      $region40: #{combine_heads_forward.5} parent=5 // pred_fallthru
        _
    $region6: #{combine_heads_forward.5} parent=1 // loop_footer
      %s16 = sadd.s32 1, %s12
    $region7: #{combine_heads_forward.5} parent=1 // loop_footer_branch
      %11 = sbr.rel target = $region3
    $region8: #{combine_heads_forward.5} parent=1 // loop_exit
      _
    %229 = vsyncpa [#allocation3], 1
    %s230 = scalar_lea.sflag [#allocation3], 1
    %231 = vsyncpa %s230, 1

// kernel: combine_heads_forward.4
$region0: #{combine_heads_forward.4}
  #allocation0 [shape = 'u32[]', space=smem, size = 0x4, offset = 0x4, fixed_abs, tag = 'smem constant byte address 0x4 - core index']
  #allocation1 [shape = 'u32[72,128]{1,0:T(1,128)}', space=vmem, size = 0x9000, scoped, tag = 'internal scratch']
  %s0 = inlined_call_operand.vmem [shape: f32[96,128], index: 0, kind: input, shape index: {}]
  %s1 = inlined_call_operand.vmem [shape: bf16[384,128], index: 1, kind: input, shape index: {}]
  %s2 = inlined_call_operand.vmem [shape: f32[1,128], index: 2, kind: input, shape index: {}]
  %s3 = inlined_call_operand.vmem [shape: f32[1,128], index: 3, kind: input, shape index: {}]
  %s4 = inlined_call_operand.vmem [shape: f32[96,128], index: 4, kind: output, shape index: {0}]
  %s5 = inlined_call_operand.vmem [shape: f32[6,2,128], index: 5, kind: output, shape index: {1}]
  %6 = xla_tuple %s4, %s5
  %s7 = sld [smem:[#allocation0]]
  $region57: #{combine_heads_forward.4} parent=0
    _
  %s9 = ssub.s32 1, %s7
  %s10 = scalar_select 0, %s9, %s7
  loop: start=0, step=1, limit=8
  $region2: #{combine_heads_forward.4} parent=0 // loop_pre_header
    _
  $region3: #{combine_heads_forward.4} parent=0 // loop_header
    %s12 = sphi 0, %s16
    %p13 = scmp.ge.s32.totalorder %s12, 8
    %s22 = sphi 0, %s24
    %s25 = sphi 0, %s22
    %s26 = sphi 0, %s25
    %s42 = sphi 0, %s26
    %s46 = sphi 0, %s46
    %s48 = sphi 0, %s46
    %s49 = sphi 0, %s48
    %s63 = sphi 0, %s49
    %s67 = sphi 0, %s67
    %s69 = sphi 0, %s67
    %s70 = sphi 0, %s69
    %s84 = sphi 0, %s70
    %s88 = sphi 0, %s88
    %s90 = sphi 0, %s88
    %s91 = sphi 0, %s90
    %s105 = sphi 0, %s91
    %s111 = sphi 0, %s113
    %s114 = sphi 0, %s111
    %s115 = sphi 0, %s114
    %s131 = sphi 0, %s115
    %s137 = sphi 0, %s139
    %s140 = sphi 0, %s137
    %s141 = sphi 0, %s140
    %s157 = sphi 0, %s141
  $region4: #{combine_heads_forward.4} parent=0 // loop_header_branch
    %15 = sbr.rel (%p13) target = $region8
  $region5: #{combine_heads_forward.4} parent=0 // loop_body
    %s17 = ssub.s32 %s12, 1
    %s18 = ssub.s32 %s12, 2
    %s19 = sadd.s32 %s12, 1
    %s20 = ssub.s32 %s12, %s19
    %p21 = scmp.eq.s32.totalorder %s20, 0
    %s23 = sadd.s32 %s22, 1
    %s24 = scalar_select %p21, %s22, %s23
    %p27 = pneg %p21
    %p28 = scmp.eq.s32.totalorder %s12, 5
    %p29 = por %p27, %p28
    %p30 = scmp.ne.s32.totalorder %s22, %s25
    %p31 = scmp.eq.s32.totalorder %s12, 0
    %p32 = por %p30, %p31
    %p33 = scmp.ne.s32.totalorder %s22, %s25
    %p34 = scmp.eq.s32.totalorder %s17, 5
    %p35 = por %p33, %p34
    %p36 = scmp.ne.s32.totalorder %s25, %s26
    %p37 = scmp.eq.s32.totalorder %s17, 0
    %p38 = por %p36, %p37
    %p39 = scmp.ne.s32.totalorder %s25, %s26
    %p40 = scmp.eq.s32.totalorder %s18, 5
    %p41 = por %p39, %p40
    %p43 = scmp.ne.s32.totalorder %s26, %s42
    %p44 = scmp.eq.s32.totalorder %s18, 0
    %p45 = por %p43, %p44
    %s47 = sadd.s32 %s46, 1
    %p50 = scmp.eq.s32.totalorder %s12, 5
    %p51 = scmp.ne.s32.totalorder %s46, %s48
    %p52 = scmp.eq.s32.totalorder %s12, 0
    %p53 = por %p51, %p52
    %p54 = scmp.ne.s32.totalorder %s46, %s48
    %p55 = scmp.eq.s32.totalorder %s17, 5
    %p56 = por %p54, %p55
    %p57 = scmp.ne.s32.totalorder %s48, %s49
    %p58 = scmp.eq.s32.totalorder %s17, 0
    %p59 = por %p57, %p58
    %p60 = scmp.ne.s32.totalorder %s48, %s49
    %p61 = scmp.eq.s32.totalorder %s18, 5
    %p62 = por %p60, %p61
    %p64 = scmp.ne.s32.totalorder %s49, %s63
    %p65 = scmp.eq.s32.totalorder %s18, 0
    %p66 = por %p64, %p65
    %s68 = sadd.s32 %s67, 1
    %p71 = scmp.eq.s32.totalorder %s12, 5
    %p72 = scmp.ne.s32.totalorder %s67, %s69
    %p73 = scmp.eq.s32.totalorder %s12, 0
    %p74 = por %p72, %p73
    %p75 = scmp.ne.s32.totalorder %s67, %s69
    %p76 = scmp.eq.s32.totalorder %s17, 5
    %p77 = por %p75, %p76
    %p78 = scmp.ne.s32.totalorder %s69, %s70
    %p79 = scmp.eq.s32.totalorder %s17, 0
    %p80 = por %p78, %p79
    %p81 = scmp.ne.s32.totalorder %s69, %s70
    %p82 = scmp.eq.s32.totalorder %s18, 5
    %p83 = por %p81, %p82
    %p85 = scmp.ne.s32.totalorder %s70, %s84
    %p86 = scmp.eq.s32.totalorder %s18, 0
    %p87 = por %p85, %p86
    %s89 = sadd.s32 %s88, 1
    %p92 = scmp.eq.s32.totalorder %s12, 5
    %p93 = scmp.ne.s32.totalorder %s88, %s90
    %p94 = scmp.eq.s32.totalorder %s12, 0
    %p95 = por %p93, %p94
    %p96 = scmp.ne.s32.totalorder %s88, %s90
    %p97 = scmp.eq.s32.totalorder %s17, 5
    %p98 = por %p96, %p97
    %p99 = scmp.ne.s32.totalorder %s90, %s91
    %p100 = scmp.eq.s32.totalorder %s17, 0
    %p101 = por %p99, %p100
    %p102 = scmp.ne.s32.totalorder %s90, %s91
    %p103 = scmp.eq.s32.totalorder %s18, 5
    %p104 = por %p102, %p103
    %p106 = scmp.ne.s32.totalorder %s91, %s105
    %p107 = scmp.eq.s32.totalorder %s18, 0
    %p108 = por %p106, %p107
    %s109 = ssub.s32 %s12, %s19
    %p110 = scmp.eq.s32.totalorder %s109, 0
    %s112 = sadd.s32 %s111, 1
    %s113 = scalar_select %p110, %s111, %s112
    %p116 = pneg %p110
    %p117 = scmp.eq.s32.totalorder %s12, 5
    %p118 = por %p116, %p117
    %p119 = scmp.ne.s32.totalorder %s111, %s114
    %p120 = scmp.eq.s32.totalorder %s12, 0
    %p121 = por %p119, %p120
    %p122 = scmp.ne.s32.totalorder %s111, %s114
    %p123 = scmp.eq.s32.totalorder %s17, 5
    %p124 = por %p122, %p123
    %p125 = scmp.ne.s32.totalorder %s114, %s115
    %p126 = scmp.eq.s32.totalorder %s17, 0
    %p127 = por %p125, %p126
    %p128 = scmp.ne.s32.totalorder %s114, %s115
    %p129 = scmp.eq.s32.totalorder %s18, 5
    %p130 = por %p128, %p129
    %p132 = scmp.ne.s32.totalorder %s115, %s131
    %p133 = scmp.eq.s32.totalorder %s18, 0
    %p134 = por %p132, %p133
    %s135 = ssub.s32 %s12, %s19
    %p136 = scmp.eq.s32.totalorder %s135, 0
    %s138 = sadd.s32 %s137, 1
    %s139 = scalar_select %p136, %s137, %s138
    %p142 = pneg %p136
    %p143 = scmp.eq.s32.totalorder %s12, 5
    %p144 = por %p142, %p143
    %p145 = scmp.ne.s32.totalorder %s137, %s140
    %p146 = scmp.eq.s32.totalorder %s12, 0
    %p147 = por %p145, %p146
    %p148 = scmp.ne.s32.totalorder %s137, %s140
    %p149 = scmp.eq.s32.totalorder %s17, 5
    %p150 = por %p148, %p149
    %p151 = scmp.ne.s32.totalorder %s140, %s141
    %p152 = scmp.eq.s32.totalorder %s17, 0
    %p153 = por %p151, %p152
    %p154 = scmp.ne.s32.totalorder %s140, %s141
    %p155 = scmp.eq.s32.totalorder %s18, 5
    %p156 = por %p154, %p155
    %p158 = scmp.ne.s32.totalorder %s141, %s157
    %p159 = scmp.eq.s32.totalorder %s18, 0
    %p160 = por %p158, %p159
    %p161 = scmp.le.s32.totalorder 1, %s12
    %p162 = scmp.lt.s32.totalorder %s12, 7
    %p163 = pnand %p161, %p162
    %p164 = pneg %p163
    // Predicated region
    $region9: #{combine_heads_forward.4} parent=5 // pred_check
      _
    $region10: #{combine_heads_forward.4} parent=5 // pred_check_branch
      %166 = sbr.rel (%p163) target = $region12
    $region11: #{combine_heads_forward.4} parent=5 // pred_region
      %s167 = ssub.s32 %s12, 1
      // Predicated region
      $region13: #{combine_heads_forward.4} parent=11 // pred_check
        %p168 = pneg %p59
      $region14: #{combine_heads_forward.4} parent=11 // pred_check_branch
        %170 = sbr.rel (%p168) target = $region16
      $region15: #{combine_heads_forward.4} parent=11 // pred_region
        _
      $region16: #{combine_heads_forward.4} parent=11 // pred_fallthru
        _
      // Predicated region
      $region17: #{combine_heads_forward.4} parent=11 // pred_check
        %p171 = pneg %p80
      $region18: #{combine_heads_forward.4} parent=11 // pred_check_branch
        %173 = sbr.rel (%p171) target = $region20
      $region19: #{combine_heads_forward.4} parent=11 // pred_region
        _
      $region20: #{combine_heads_forward.4} parent=11 // pred_fallthru
        _
      // Predicated region
      $region21: #{combine_heads_forward.4} parent=11 // pred_check
        %p174 = pneg %p101
      $region22: #{combine_heads_forward.4} parent=11 // pred_check_branch
        %176 = sbr.rel (%p174) target = $region24
      $region23: #{combine_heads_forward.4} parent=11 // pred_region
        _
      $region24: #{combine_heads_forward.4} parent=11 // pred_fallthru
        _
    $region12: #{combine_heads_forward.4} parent=5 // pred_fallthru
      _
    %p177 = scmp.lt.s32.totalorder %s12, 6
    // Predicated region
    $region25: #{combine_heads_forward.4} parent=5 // pred_check
      %p178 = pneg %p177
    $region26: #{combine_heads_forward.4} parent=5 // pred_check_branch
      %180 = sbr.rel (%p178) target = $region28
    $region27: #{combine_heads_forward.4} parent=5 // pred_region
      // Predicated region
      $region29: #{combine_heads_forward.4} parent=27 // pred_check
        %p181 = pneg %p32
      $region30: #{combine_heads_forward.4} parent=27 // pred_check_branch
        %183 = sbr.rel (%p181) target = $region32
      $region31: #{combine_heads_forward.4} parent=27 // pred_region
        %s184 = smul.u32 2, %s12
        %p185 = scmp.lt.s32.totalorder %s184, 11
        %s186 = scalar_select %p185, %s184, 11
        %s187 = smul.addr %s186, 8
        %s188 = scalar_lea.vmem %s0, %s187
        %s189 = smul.u32 2, %s12
      $region32: #{combine_heads_forward.4} parent=27 // pred_fallthru
        _
    $region28: #{combine_heads_forward.4} parent=5 // pred_fallthru
      _
    %p190 = scmp.le.s32.totalorder 1, %s12
    %p191 = scmp.lt.s32.totalorder %s12, 7
    %p192 = pnand %p190, %p191
    %p193 = pneg %p192
    // Predicated region
    $region33: #{combine_heads_forward.4} parent=5 // pred_check
      _
    $region34: #{combine_heads_forward.4} parent=5 // pred_check_branch
      %195 = sbr.rel (%p192) target = $region36
    $region35: #{combine_heads_forward.4} parent=5 // pred_region
      %s196 = ssub.s32 %s12, 1
      %s197 = smul.u32 2, %s17
      %p198 = scmp.lt.s32.totalorder %s197, 11
      %s199 = scalar_select %p198, %s197, 11
      %s200 = smul.addr %s199, 8
      %s201 = scalar_lea.vmem %s0, %s200
      %p202 = pneg %p38
      %p203 = pneg %p35
      %p204 = pneg %p59
      %p205 = pneg %p56
      %p206 = pneg %p80
      %p207 = pneg %p77
      %p208 = pneg %p101
      %p209 = pneg %p98
      %p210 = pneg %p127
      %p211 = pneg %p124
      %s212 = smul.u32 2, %s17
      %p213 = scmp.lt.s32.totalorder %s212, 11
      %s214 = scalar_select %p213, %s212, 11
      %s215 = smul.addr %s214, 8
      %s216 = scalar_lea.vmem %s4, %s215
      %p217 = pneg %p153
      %p218 = pneg %p150
      %p219 = scmp.lt.s32.totalorder %s17, 5
      %s220 = scalar_select %p219, %s17, 5
      %s221 = smul.addr %s220, 2
      %s222 = scalar_lea.vmem %s5, %s221
      %s223 = smul.u32 2, %s17
      %p224 = scmp.lt.s32.totalorder %s223, 11
      %s225 = scalar_select %p224, %s223, 11
      %s226 = smul.addr %s225, 8
      %s227 = scalar_lea.vmem %s0, %s226
      %s228 = smul.u32 2, %s17
      %s229 = smul.u32 2, %s17
      %p230 = scmp.lt.s32.totalorder %s229, 11
      %s231 = scalar_select %p230, %s229, 11
      %s232 = smul.addr %s231, 8
      %s233 = scalar_lea.vmem %s4, %s232
      %s234 = smul.u32 2, %s17
      %p235 = scmp.lt.s32.totalorder %s17, 5
      %s236 = scalar_select %p235, %s17, 5
      %s237 = smul.addr %s236, 2
      %s238 = scalar_lea.vmem %s5, %s237
      %v239 = vld [vmem:[%s227] sm:$0xff]
      %v240 = vld [vmem:[%s227 + $0x8] sm:$0xff]
      %v241 = vld [vmem:[%s2] sm:$0x1]
      %v243 = vperm.slane %v241, 0
      %v245 = vmul.f32 %v239, %v243
      %v246 = vmul.f32 %v240, %v243
      %v247 = vld [vmem:[%s3] sm:$0x1]
      %v249 = vperm.slane %v247, 0
      %v251 = vadd.f32 %v245, %v249
      %v252 = vadd.f32 %v246, %v249
      %v253 = vmul.f32 %v251, 0.2
      %v254 = vmul.f32 %v252, 0.2
      %v255 = vmax.f32 %v251, %v253
      %v256 = vmax.f32 %v252, %v254
      %v257 = vlaneseq
      %v258 = vshrl.u32 %v257, 7
      %v259 = vadd.s32 %v258, 8
      %vm260 = vcmp.lt.s32.totalorder %v258, 0
      %v261 = vsub.s32 0, %v258
      %v262 = vsel %vm260, %v261, %v258
      %v263 = vshrl.u32 %v262, 4
      %v264 = vand.u32 %v262, 15
      %v265 = vsub.s32 0, %v264
      %v266 = vsel %vm260, %v265, %v264
      %vm267 = vcmp.lt.s32.totalorder %v259, 0
      %v268 = vsub.s32 0, %v259
      %v269 = vsel %vm267, %v268, %v259
      %v270 = vshrl.u32 %v269, 4
      %v271 = vand.u32 %v269, 15
      %v272 = vsub.s32 0, %v271
      %v273 = vsel %vm267, %v272, %v271
      %vm274 = vcmp.ne.s32.totalorder %v266, 0
      %vm275 = vcmp.ne.s32.totalorder %v273, 0
      %vm276 = vcmp.lt.s32.totalorder %v266, 0
      %vm277 = vcmp.lt.s32.totalorder %v273, 0
      %vm278 = vmand %vm276, %vm274
      %vm279 = vmand %vm277, %vm275
      %v280 = vadd.s32 %v266, 16
      %v281 = vadd.s32 %v273, 16
      %v282 = vsel %vm278, %v280, %v266
      %v283 = vsel %vm279, %v281, %v273
      %vm284 = vcmp.ne.s32.totalorder %v282, 0
      %vm285 = vcmp.ne.s32.totalorder %v283, 0
      %vm286 = vcmp.ne.s32.totalorder %v282, 15
      %vm287 = vcmp.ne.s32.totalorder %v283, 15
      %v288 = vrot.slane %v255, 7
      %v289 = vrot.slane %v256, 7
      %vm290 = vcmp.lt.s32.totalorder %v258, 1
      %v291 = vsel %vm290, %v288, %v289
      %v292 = vsel %vm290, %v289, %v288
      %v293 = vsel %vm284, 1, 0
      %v294 = vsel %vm285, 1, 0
      %vm295 = vcmp.eq.s32.totalorder %v293, 1
      %vm296 = vcmp.eq.s32.totalorder %v294, 1
      %v297 = vsel %vm295, %v292, 0.0
      %v298 = vsel %vm296, %v291, 0.0
      %v299 = vrot.slane %v255, 1
      %v300 = vrot.slane %v256, 1
      %vm301 = vcmp.lt.s32.totalorder %v258, 7
      %v302 = vsel %vm301, %v299, %v300
      %v303 = vsel %vm301, %v300, %v299
      %v304 = vsel %vm286, 1, 0
      %v305 = vsel %vm287, 1, 0
      %vm306 = vcmp.eq.s32.totalorder %v304, 1
      %vm307 = vcmp.eq.s32.totalorder %v305, 1
      %v308 = vsel %vm306, %v302, 0.0
      %v309 = vsel %vm307, %v303, 0.0
      %v310 = vpack.c.bf16 %v298, %v297
      %v311 = vpack.c.bf16 %v256, %v255
      %v312 = vpack.c.bf16 %v309, %v308
      %v313 = vld [vmem:[%s1] sm:$0xf]
      %v314 = vld [vmem:[%s1 + $0x4] sm:$0xf]
      %v315 = vld [vmem:[%s1 + $0x8] sm:$0xf]
      %v316 = vld [vmem:[%s1 + $0xc] sm:$0xf]
      %v317 = vld [vmem:[%s1 + $0x10] sm:$0xf]
      %v318 = vld [vmem:[%s1 + $0x14] sm:$0xf]
      %v319 = vld [vmem:[%s1 + $0x18] sm:$0xf]
      %v320 = vld [vmem:[%s1 + $0x1c] sm:$0xf]
      %v321 = vld [vmem:[%s1 + $0x20] sm:$0xf]
      %v322 = vld [vmem:[%s1 + $0x24] sm:$0xf]
      %v323 = vld [vmem:[%s1 + $0x28] sm:$0xf]
      %v324 = vld [vmem:[%s1 + $0x2c] sm:$0xf]
      %v325 = vld [vmem:[%s1 + $0x30] sm:$0xf]
      %v326 = vld [vmem:[%s1 + $0x34] sm:$0xf]
      %v327 = vld [vmem:[%s1 + $0x38] sm:$0xf]
      %v328 = vld [vmem:[%s1 + $0x3c] sm:$0xf]
      %v329 = vld [vmem:[%s1 + $0x40] sm:$0xf]
      %v330 = vld [vmem:[%s1 + $0x44] sm:$0xf]
      %v331 = vld [vmem:[%s1 + $0x48] sm:$0xf]
      %v332 = vld [vmem:[%s1 + $0x4c] sm:$0xf]
      %v333 = vld [vmem:[%s1 + $0x50] sm:$0xf]
      %v334 = vld [vmem:[%s1 + $0x54] sm:$0xf]
      %v335 = vld [vmem:[%s1 + $0x58] sm:$0xf]
      %v336 = vld [vmem:[%s1 + $0x5c] sm:$0xf]
      %v337 = vld [vmem:[%s1 + $0x60] sm:$0xf]
      %v338 = vld [vmem:[%s1 + $0x64] sm:$0xf]
      %v339 = vld [vmem:[%s1 + $0x68] sm:$0xf]
      %v340 = vld [vmem:[%s1 + $0x6c] sm:$0xf]
      %v341 = vld [vmem:[%s1 + $0x70] sm:$0xf]
      %v342 = vld [vmem:[%s1 + $0x74] sm:$0xf]
      %v343 = vld [vmem:[%s1 + $0x78] sm:$0xf]
      %v344 = vld [vmem:[%s1 + $0x7c] sm:$0xf]
      %v345 = vld [vmem:[%s1 + $0x80] sm:$0xf]
      %v346 = vld [vmem:[%s1 + $0x84] sm:$0xf]
      %v347 = vld [vmem:[%s1 + $0x88] sm:$0xf]
      %v348 = vld [vmem:[%s1 + $0x8c] sm:$0xf]
      %v349 = vld [vmem:[%s1 + $0x90] sm:$0xf]
      %v350 = vld [vmem:[%s1 + $0x94] sm:$0xf]
      %v351 = vld [vmem:[%s1 + $0x98] sm:$0xf]
      %v352 = vld [vmem:[%s1 + $0x9c] sm:$0xf]
      %v353 = vld [vmem:[%s1 + $0xa0] sm:$0xf]
      %v354 = vld [vmem:[%s1 + $0xa4] sm:$0xf]
      %v355 = vld [vmem:[%s1 + $0xa8] sm:$0xf]
      %v356 = vld [vmem:[%s1 + $0xac] sm:$0xf]
      %v357 = vld [vmem:[%s1 + $0xb0] sm:$0xf]
      %v358 = vld [vmem:[%s1 + $0xb4] sm:$0xf]
      %v359 = vld [vmem:[%s1 + $0xb8] sm:$0xf]
      %v360 = vld [vmem:[%s1 + $0xbc] sm:$0xf]
      %v409 = vunpack.c.l.b16 %v313
      %v410 = vunpack.c.l.b16 %v314
      %v411 = vunpack.c.l.b16 %v315
      %v412 = vunpack.c.l.b16 %v316
      %v413 = vunpack.c.l.b16 %v317
      %v414 = vunpack.c.l.b16 %v318
      %v415 = vunpack.c.l.b16 %v319
      %v416 = vunpack.c.l.b16 %v320
      %v417 = vunpack.c.l.b16 %v321
      %v418 = vunpack.c.l.b16 %v322
      %v419 = vunpack.c.l.b16 %v323
      %v420 = vunpack.c.l.b16 %v324
      %v421 = vunpack.c.l.b16 %v325
      %v422 = vunpack.c.l.b16 %v326
      %v423 = vunpack.c.l.b16 %v327
      %v424 = vunpack.c.l.b16 %v328
      %v425 = vunpack.c.l.b16 %v329
      %v426 = vunpack.c.l.b16 %v330
      %v427 = vunpack.c.l.b16 %v331
      %v428 = vunpack.c.l.b16 %v332
      %v429 = vunpack.c.l.b16 %v333
      %v430 = vunpack.c.l.b16 %v334
      %v431 = vunpack.c.l.b16 %v335
      %v432 = vunpack.c.l.b16 %v336
      %v433 = vunpack.c.l.b16 %v337
      %v434 = vunpack.c.l.b16 %v338
      %v435 = vunpack.c.l.b16 %v339
      %v436 = vunpack.c.l.b16 %v340
      %v437 = vunpack.c.l.b16 %v341
      %v438 = vunpack.c.l.b16 %v342
      %v439 = vunpack.c.l.b16 %v343
      %v440 = vunpack.c.l.b16 %v344
      %v441 = vunpack.c.l.b16 %v345
      %v442 = vunpack.c.l.b16 %v346
      %v443 = vunpack.c.l.b16 %v347
      %v444 = vunpack.c.l.b16 %v348
      %v445 = vunpack.c.l.b16 %v349
      %v446 = vunpack.c.l.b16 %v350
      %v447 = vunpack.c.l.b16 %v351
      %v448 = vunpack.c.l.b16 %v352
      %v449 = vunpack.c.l.b16 %v353
      %v450 = vunpack.c.l.b16 %v354
      %v451 = vunpack.c.l.b16 %v355
      %v452 = vunpack.c.l.b16 %v356
      %v453 = vunpack.c.l.b16 %v357
      %v454 = vunpack.c.l.b16 %v358
      %v455 = vunpack.c.l.b16 %v359
      %v456 = vunpack.c.l.b16 %v360
      %v457 = vpack.c.b16 %v410, %v409
      %v458 = vpack.c.b16 %v412, %v411
      %v459 = vpack.c.b16 %v414, %v413
      %v460 = vpack.c.b16 %v416, %v415
      %v461 = vpack.c.b16 %v418, %v417
      %v462 = vpack.c.b16 %v420, %v419
      %v463 = vpack.c.b16 %v422, %v421
      %v464 = vpack.c.b16 %v424, %v423
      %v465 = vpack.c.b16 %v426, %v425
      %v466 = vpack.c.b16 %v428, %v427
      %v467 = vpack.c.b16 %v430, %v429
      %v468 = vpack.c.b16 %v432, %v431
      %v469 = vpack.c.b16 %v434, %v433
      %v470 = vpack.c.b16 %v436, %v435
      %v471 = vpack.c.b16 %v438, %v437
      %v472 = vpack.c.b16 %v440, %v439
      %v473 = vpack.c.b16 %v442, %v441
      %v474 = vpack.c.b16 %v444, %v443
      %v475 = vpack.c.b16 %v446, %v445
      %v476 = vpack.c.b16 %v448, %v447
      %v477 = vpack.c.b16 %v450, %v449
      %v478 = vpack.c.b16 %v452, %v451
      %v479 = vpack.c.b16 %v454, %v453
      %v480 = vpack.c.b16 %v456, %v455
      %505 = vmatpush.bf16.msra.mxu0 %v464
      %506 = vmatpush.bf16.msra.mxu0 %v463
      %507 = vmatpush.bf16.msra.mxu0 %v462
      %508 = vmatpush.bf16.msra.mxu0 %v461
      %509 = vmatpush.bf16.msra.mxu0 %v460
      %510 = vmatpush.bf16.msra.mxu0 %v459
      %511 = vmatpush.bf16.msra.mxu0 %v458
      %512 = vmatpush.bf16.msra.mxu0 %v457
      %513 = vmatmul.bf16.gmra.mxu0 %v310
      %v514 = vpop.f32.mrf.mxu0
      %v515 = vadd.f32 0.0, %v514
      %v516 = vpop.f32.mrf.mxu0
      %v517 = vadd.f32 0.0, %v516
      %518 = vdwg.mxu0
      %519 = vmatpush.bf16.msra.mxu0 %v472
      %520 = vmatpush.bf16.msra.mxu0 %v471
      %521 = vmatpush.bf16.msra.mxu0 %v470
      %522 = vmatpush.bf16.msra.mxu0 %v469
      %523 = vmatpush.bf16.msra.mxu0 %v468
      %524 = vmatpush.bf16.msra.mxu0 %v467
      %525 = vmatpush.bf16.msra.mxu0 %v466
      %526 = vmatpush.bf16.msra.mxu0 %v465
      %527 = vmatmul.bf16.gmra.mxu0 %v311
      %v528 = vpop.f32.mrf.mxu0
      %v529 = vadd.f32 %v515, %v528
      %v530 = vpop.f32.mrf.mxu0
      %v531 = vadd.f32 %v517, %v530
      %532 = vdwg.mxu0
      %533 = vmatpush.bf16.msra.mxu0 %v480
      %534 = vmatpush.bf16.msra.mxu0 %v479
      %535 = vmatpush.bf16.msra.mxu0 %v478
      %536 = vmatpush.bf16.msra.mxu0 %v477
      %537 = vmatpush.bf16.msra.mxu0 %v476
      %538 = vmatpush.bf16.msra.mxu0 %v475
      %539 = vmatpush.bf16.msra.mxu0 %v474
      %540 = vmatpush.bf16.msra.mxu0 %v473
      %541 = vmatmul.bf16.gmra.mxu0 %v312
      %v542 = vpop.f32.mrf.mxu0
      %v543 = vadd.f32 %v529, %v542
      %v544 = vpop.f32.mrf.mxu0
      %v545 = vadd.f32 %v531, %v544
      %546 = vdwg.mxu0
      %547 = vst [vmem:[%s233] sm:$0xff] %v543
      %548 = vst [vmem:[%s233 + $0x8] sm:$0xff] %v545
      %v549 = vadd.f32 %v543, %v545
      %v550 = vrot.slane %v549, 4
      %v551 = vadd.f32 %v549, %v550
      %v552 = vrot.slane %v551, 2
      %v553 = vadd.f32 %v551, %v552
      %v554 = vrot.slane %v553, 1
      %v555 = vadd.f32 %v553, %v554
      %v556 = vmul.f32 %v555, 0.0625
      %v557 = vsub.f32 %v543, %v556
      %v558 = vsub.f32 %v545, %v556
      %v559 = vmul.f32 %v557, %v557
      %v560 = vmul.f32 %v558, %v558
      %v561 = vadd.f32 %v559, %v560
      %v562 = vrot.slane %v561, 4
      %v563 = vadd.f32 %v561, %v562
      %v564 = vrot.slane %v563, 2
      %v565 = vadd.f32 %v563, %v564
      %v566 = vrot.slane %v565, 1
      %v567 = vadd.f32 %v565, %v566
      %vm568 = vcmask 1040384
      %v569 = vsel %vm568, %v555, %v567
      %570 = vst [vmem:[%s238] sm:$0x3] %v569
      %s571 = smul.u32 2, %s17
      %p572 = scmp.lt.s32.totalorder %s571, 11
      %s573 = scalar_select %p572, %s571, 11
      %s574 = smul.addr %s573, 8
      %s575 = scalar_lea.vmem %s4, %s574
      %p576 = scmp.lt.s32.totalorder %s17, 5
      %s577 = scalar_select %p576, %s17, 5
      %s578 = smul.addr %s577, 2
      %s579 = scalar_lea.vmem %s5, %s578
      // Predicated region
      $region37: #{combine_heads_forward.4} parent=35 // pred_check
        %p580 = pneg %p124
      $region38: #{combine_heads_forward.4} parent=35 // pred_check_branch
        %582 = sbr.rel (%p580) target = $region40
      $region39: #{combine_heads_forward.4} parent=35 // pred_region
        %s583 = smul.u32 2, %s17
      $region40: #{combine_heads_forward.4} parent=35 // pred_fallthru
        _
      // Predicated region
      $region41: #{combine_heads_forward.4} parent=35 // pred_check
        %p584 = pneg %p150
      $region42: #{combine_heads_forward.4} parent=35 // pred_check_branch
        %586 = sbr.rel (%p584) target = $region44
      $region43: #{combine_heads_forward.4} parent=35 // pred_region
        _
      $region44: #{combine_heads_forward.4} parent=35 // pred_fallthru
        _
    $region36: #{combine_heads_forward.4} parent=5 // pred_fallthru
      _
    %p587 = scmp.le.s32.totalorder 2, %s12
    // Predicated region
    $region45: #{combine_heads_forward.4} parent=5 // pred_check
      %p588 = pneg %p587
    $region46: #{combine_heads_forward.4} parent=5 // pred_check_branch
      %590 = sbr.rel (%p588) target = $region48
    $region47: #{combine_heads_forward.4} parent=5 // pred_region
      %s591 = ssub.s32 %s12, 2
      // Predicated region
      $region49: #{combine_heads_forward.4} parent=47 // pred_check
        %p592 = pneg %p130
      $region50: #{combine_heads_forward.4} parent=47 // pred_check_branch
        %594 = sbr.rel (%p592) target = $region52
      $region51: #{combine_heads_forward.4} parent=47 // pred_region
        %s595 = smul.u32 2, %s18
        %p596 = scmp.lt.s32.totalorder %s595, 11
        %s597 = scalar_select %p596, %s595, 11
        %s598 = smul.addr %s597, 8
        %s599 = scalar_lea.vmem %s4, %s598
      $region52: #{combine_heads_forward.4} parent=47 // pred_fallthru
        _
      // Predicated region
      $region53: #{combine_heads_forward.4} parent=47 // pred_check
        %p600 = pneg %p156
      $region54: #{combine_heads_forward.4} parent=47 // pred_check_branch
        %602 = sbr.rel (%p600) target = $region56
      $region55: #{combine_heads_forward.4} parent=47 // pred_region
        %p603 = scmp.lt.s32.totalorder %s18, 5
        %s604 = scalar_select %p603, %s18, 5
        %s605 = smul.addr %s604, 2
        %s606 = scalar_lea.vmem %s5, %s605
      $region56: #{combine_heads_forward.4} parent=47 // pred_fallthru
        _
    $region48: #{combine_heads_forward.4} parent=5 // pred_fallthru
      _
  $region6: #{combine_heads_forward.4} parent=0 // loop_footer
    %s16 = sadd.s32 1, %s12
  $region7: #{combine_heads_forward.4} parent=0 // loop_footer_branch
    %11 = sbr.rel target = $region3
  $region8: #{combine_heads_forward.4} parent=0 // loop_exit
    _

</llo_original>
